<compile_context>
chip_gen: v6e
topology: v6e:2x2x1
jax: 0.10.0
libtpu: 0.0.40
codegen_flags: <defaults>
</compile_context>

<pallas_src>
import jax
import jax.numpy as jnp
import numpy as np
from jax.experimental import pallas as pl
from jax.experimental.pallas import tpu as pltpu

FE_CNN_UNUM = 128      # conv channels
FE_MLP_UNUM = 128      # per-branch MLP width
FE_LATENT_UNUM = 1024  # latent MLP width
NEG_SLOPE = 0.01       # nn.LeakyReLU default
A_PAD = 128            # lane-dense policy-head width


def _lrelu(x):
    # max(x, a*x) == LeakyReLU(x) for 0 < a < 1; one fewer VPU op than where().
    return jnp.maximum(x, NEG_SLOPE * x)


def _round_up(x, m):
    return ((x + m - 1) // m) * m


# ---------------------------------------------------------------------------
# Kernel: one fused block-diagonal branch matmul + hidden MLP + policy softmax
# ---------------------------------------------------------------------------
def actor_kernel(x_ref, wbr_ref, wmlp_ref, wpol_ref, bias_ref, out_ref):
    f32 = jnp.float32
    bf16 = jnp.bfloat16
    feat_dim = wbr_ref.shape[1]
    hidden = wmlp_ref.shape[1]
    a_pad = wpol_ref.shape[1]

    # static, 128-aligned slices of the packed f32 bias slab
    b_branch = bias_ref[:, 0:feat_dim]
    b_mlp = bias_ref[:, feat_dim:feat_dim + hidden]
    b_pol = bias_ref[:, feat_dim + hidden:feat_dim + hidden + a_pad]

    # all nine feature-extractor branches as a single (TB,K)@(K,2048) bf16 matmul
    xb = x_ref[...].astype(bf16)
    feat = _lrelu(jnp.dot(xb, wbr_ref[...],
                          preferred_element_type=f32) + b_branch)       # (TB, 2048) f32

    # hidden MLP (bf16 inputs, f32 accumulate)
    h = _lrelu(jnp.dot(feat.astype(bf16), wmlp_ref[...],
                       preferred_element_type=f32) + b_mlp)             # (TB, hidden) f32

    # policy head (padded logit columns carry f32 bias -1e30 -> vanish in softmax)
    logits = jnp.dot(h.astype(bf16), wpol_ref[...],
                     preferred_element_type=f32) + b_pol
    m = jnp.max(logits, axis=1, keepdims=True)
    e = jnp.exp(logits - m)
    s = jnp.sum(e, axis=1, keepdims=True)
    out_ref[...] = e * pl.reciprocal(s, approx=True)                    # (TB, 128)


# ---------------------------------------------------------------------------
# Host-side glue / packing
# ---------------------------------------------------------------------------
def build_input(states, latent):
    """Packed input row: [fut win0|win1|win2 | latent | buf | qual | chunk | thp | dl]."""
    B, C, T = states.shape
    thp = states[:, 0, :]                 # (B, T)
    dl = states[:, 10, :]                 # (B, T)
    buf = states[:, 1, T - 1:T]           # (B, 1)
    qual = states[:, 2, T - 1:T]          # (B, 1)
    chunk = states[:, 3, T - 1:T]         # (B, 1)
    fut = states[:, 4:10, T - 1]          # (B, 6)
    return jnp.concatenate(
        [fut[:, 0:4], fut[:, 1:5], fut[:, 2:6],
         latent, buf, qual, chunk, thp, dl], axis=1)


def pack_params(params, his_dim, latent_dim, hidden, a_dim, a_pad=A_PAD):
    """Build the 4 parameter slabs consumed by the kernel (done once, host-side)."""
    CNN, FE, LAT = FE_CNN_UNUM, FE_MLP_UNUM, FE_LATENT_UNUM
    feat_dim = 3 * CNN + LAT + 5 * FE      # 2048
    K = 12 + latent_dim + 3 + 2 * his_dim
    K_pad = _round_up(K, 64)               # 63 -> 64: no all-zero 128-pad rows

    # block-diagonal branch weight (K_pad, feat_dim)
    wbr = np.zeros((K_pad, feat_dim), np.float32)
    wc = np.asarray(params["wc"])          # (4, CNN)
    r, c = 0, 0
    for _ in range(3):                     # conv positions p0, p1, p2
        wbr[r:r + 4, c:c + CNN] = wc
        r += 4
        c += CNN
    wbr[r:r + latent_dim, c:c + LAT] = np.asarray(params["wlat"])
    r += latent_dim
    c += LAT
    for name in ("w1", "w2", "w3"):
        wbr[r:r + 1, c:c + FE] = np.asarray(params[name])
        r += 1
        c += FE
    wbr[r:r + his_dim, c:c + FE] = np.asarray(params["wt"])
    r += his_dim
    c += FE
    wbr[r:r + his_dim, c:c + FE] = np.asarray(params["wd"])
    r += his_dim
    c += FE
    assert r == K and c == feat_dim

    b_branch = np.concatenate(
        [np.asarray(params["bc"])] * 3
        + [np.asarray(params[n]) for n in ("blat", "b1", "b2", "b3", "bt", "bd")],
        axis=1)                                              # (1, feat_dim)

    # lane-dense policy head: zero-pad weights, -1e30-pad biases (masked softmax)
    wpol = np.zeros((hidden, a_pad), np.float32)
    wpol[:, :a_dim] = np.asarray(params["wpol"])
    bpol = np.full((1, a_pad), -1e30, np.float32)
    bpol[:, :a_dim] = np.asarray(params["bpol"])

    bias = np.concatenate([b_branch, np.asarray(params["bmlp"]), bpol], axis=1)

    return dict(
        wbr=jnp.asarray(wbr, jnp.bfloat16),                      # (K_pad, 2048) bf16
        wmlp=jnp.asarray(params["wmlp"], jnp.bfloat16),          # (2048, hidden) bf16
        wpol=jnp.asarray(wpol, jnp.bfloat16),                    # (hidden, 128) bf16
        bias=jnp.asarray(bias, jnp.float32),                     # (1, 2048 + hidden + 128) f32
        K=K,
    )


def _batch_tile(B):
    """Generation-aware batch tile: >=2 grid steps (v7x megacore), capped per VMEM."""
    cap = 256
    try:
        kind = jax.devices()[0].device_kind.lower()
        if ("v6" in kind) or ("v7" in kind):
            cap = 512          # big tiles amortize per-step overhead; fits 32 MiB scoped VMEM
        else:
            cap = 256          # conservative for v5e (16 MiB scoped default) and older
    except Exception:
        cap = 256
    tb = _round_up(max(8, -(-B // 2)), 8)   # cdiv(B, 2) rounded up to 8 sublanes
    return min(cap, tb)


def actor_forward(states, latent, packed, a_dim):
    """states: (B, C, T) float32, latent: (B, latent_dim) float32 -> (B, a_dim) probs."""
    x = build_input(states, latent)                          # (B, K) f32
    B, K = x.shape
    K_pad = packed["wbr"].shape[0]
    feat_dim = packed["wbr"].shape[1]
    hidden = packed["wmlp"].shape[1]
    a_pad = packed["wpol"].shape[1]
    bias_w = packed["bias"].shape[1]

    # pad K to the packed width (block last dim == full array dim) and B to tile
    TB = _batch_tile(B)
    B_pad = _round_up(B, TB)
    x = jnp.pad(x, ((0, B_pad - B), (0, K_pad - K)))

    flops = 2 * B_pad * (K_pad * feat_dim + feat_dim * hidden + hidden * a_pad)
    bytes_accessed = (4 * (x.size + packed["bias"].size + B_pad * a_pad)
                      + 2 * (packed["wbr"].size + packed["wmlp"].size
                             + packed["wpol"].size))

    out = pl.pallas_call(
        actor_kernel,
        out_shape=jax.ShapeDtypeStruct((B_pad, a_pad), jnp.float32),
        grid_spec=pltpu.PrefetchScalarGridSpec(
            num_scalar_prefetch=0,
            grid=(B_pad // TB,),
            in_specs=[
                pl.BlockSpec((TB, K_pad), lambda i: (i, 0)),
                # constant index_maps: weights/bias DMA'd once, not per grid step
                pl.BlockSpec((K_pad, feat_dim), lambda i: (0, 0)),
                pl.BlockSpec((feat_dim, hidden), lambda i: (0, 0)),
                pl.BlockSpec((hidden, a_pad), lambda i: (0, 0)),
                pl.BlockSpec((1, bias_w), lambda i: (0, 0)),
            ],
            out_specs=pl.BlockSpec((TB, a_pad), lambda i: (i, 0)),
        ),
        compiler_params=pltpu.CompilerParams(
            dimension_semantics=("parallel",)),
        cost_estimate=pl.CostEstimate(
            flops=flops,
            transcendentals=B_pad * (a_pad + 1),
            bytes_accessed=bytes_accessed),
    )(x, packed["wbr"], packed["wmlp"], packed["wpol"], packed["bias"])

    return out[:B, :a_dim]


# ---------------------------------------------------------------------------
# Synthetic parameters + pure-JAX reference (same math as the PyTorch module)
# ---------------------------------------------------------------------------
def init_params(key, a_dim, latent_dim, his_dim, hidden):
    """Deterministic synthetic parameters (shapes per Actor.__init__)."""
    FE, CNN, LAT = FE_MLP_UNUM, FE_CNN_UNUM, FE_LATENT_UNUM
    feat_dim = LAT + 3 * CNN + 5 * FE      # 1024 + 384 + 640 = 2048
    ks = jax.random.split(key, 20)

    def w(k, shape, scale=0.05):
        return jax.random.normal(k, shape, jnp.float32) * scale

    params = dict(
        w1=w(ks[0], (1, FE)), b1=w(ks[1], (1, FE)),
        w2=w(ks[2], (1, FE)), b2=w(ks[3], (1, FE)),
        w3=w(ks[4], (1, FE)), b3=w(ks[5], (1, FE)),
        wt=w(ks[6], (his_dim, FE)), bt=w(ks[7], (1, FE)),
        wd=w(ks[8], (his_dim, FE)), bd=w(ks[9], (1, FE)),
        bc=w(ks[11], (1, CNN)),
        wlat=w(ks[12], (latent_dim, LAT)), blat=w(ks[13], (1, LAT)),
        bmlp=w(ks[16], (1, hidden)),
        wpol=w(ks[17], (hidden, a_dim)), bpol=w(ks[18], (1, a_dim)),
    )

    # Conv weight in PyTorch convention (out_ch=128, in_ch=1, k=4) -> (k, out_ch)
    wc_pt = w(ks[10], (CNN, 1, 4))
    params["wc"] = jnp.transpose(wc_pt[:, 0, :], (1, 0))          # (4, 128)

    # First hidden-MLP weight in PyTorch convention (hidden, feat_dim): PyTorch
    # flattens the Conv1d output channel-major (c*3 + p); the kernel lays out
    # the conv features position-major (p*CNN + c), so permute the columns
    # accordingly, then transpose for x @ W.
    wmlp_pt = w(ks[14], (hidden, feat_dim))
    c = jnp.arange(CNN)
    p = jnp.arange(3)
    perm_cnn = (c[None, :] * 3 + p[:, None]).reshape(-1)
    perm = jnp.concatenate([perm_cnn, jnp.arange(3 * CNN, feat_dim)])
    params["wmlp"] = jnp.transpose(wmlp_pt[:, perm], (1, 0))      # (feat_dim, hidden)
    return params


def actor_reference(states, latent, params):
    """Pure-JAX f32 reference (same math as the original module) for correctness."""
    lrelu = lambda x: jnp.where(x >= 0, x, NEG_SLOPE * x)
    T = states.shape[2]
    thp, dl = states[:, 0, :], states[:, 10, :]
    buf, qual, chunk = states[:, 1, T - 1:T], states[:, 2, T - 1:T], states[:, 3, T - 1:T]
    fut = states[:, 4:10, T - 1]
    f1 = lrelu(buf @ params["w1"] + params["b1"])
    f2 = lrelu(qual @ params["w2"] + params["b2"])
    f3 = lrelu(chunk @ params["w3"] + params["b3"])
    ft = lrelu(thp @ params["wt"] + params["bt"])
    fd = lrelu(dl @ params["wd"] + params["bd"])
    flat_ = lrelu(latent @ params["wlat"] + params["blat"])
    ps = [lrelu(fut[:, i:i + 4] @ params["wc"] + params["bc"]) for i in range(3)]
    feat = jnp.concatenate(ps + [flat_, f1, f2, f3, ft, fd], axis=1)
    h = lrelu(feat @ params["wmlp"] + params["bmlp"])
    logits = h @ params["wpol"] + params["bpol"]
    return jax.nn.softmax(logits, axis=1)


if __name__ == "__main__":
    key = jax.random.PRNGKey(0)
    B, C, T = 2, 11, 8            # batch, state_channels, his_dim
    latent_dim, a_dim = 32, 6
    hidden = 128                  # hidden_layers default = [128]

    k1, k2, k3 = jax.random.split(key, 3)
    states = jax.random.normal(k1, (B, C, T), jnp.float32)
    latent = jax.random.normal(k2, (B, latent_dim), jnp.float32)
    params = init_params(k3, a_dim, latent_dim, T, hidden)
    packed = pack_params(params, T, latent_dim, hidden, a_dim)

    out = actor_forward(states, latent, packed, a_dim)
    out = jax.block_until_ready(out)

    ref = actor_reference(states, latent, params)
    # bf16 weights/activations in the matmuls + approx reciprocal in the softmax
    # -> relaxed tolerance vs the f32 reference.
    np.testing.assert_allclose(np.asarray(out), np.asarray(ref), rtol=3e-2, atol=1e-2)
    np.testing.assert_allclose(np.asarray(out).sum(axis=1), np.ones(B), rtol=5e-3, atol=5e-3)
    print("KERNEL_OK")
</pallas_src>

<mosaic_0001>
module attributes {stable_mosaic.version = 11 : i64} {
  func.func @actor_kernel(%arg0: i32, %arg1: memref<8x64xf32, #tpu.memory_space<vmem>>, %arg2: memref<64x2048xbf16, #tpu.memory_space<vmem>>, %arg3: memref<2048x128xbf16, #tpu.memory_space<vmem>>, %arg4: memref<128x128xbf16, #tpu.memory_space<vmem>>, %arg5: memref<1x2304xf32, #tpu.memory_space<vmem>>, %arg6: memref<8x128xf32, #tpu.memory_space<vmem>>) attributes {dimension_semantics = [#tpu.dimension_semantics<parallel>], iteration_bounds = array<i64: 1>, scalar_prefetch = 0 : i64, scratch_operands = 0 : i64, tpu.core_type = #tpu.core_type<tc>, window_params = [{transform_indices = @transform_0, window_bounds = array<i64: 8, 64>}, {pipeline_mode = #tpu.pipeline_mode<synchronous>, transform_indices = @transform_1, window_bounds = array<i64: 64, 2048>}, {pipeline_mode = #tpu.pipeline_mode<synchronous>, transform_indices = @transform_2, window_bounds = array<i64: 2048, 128>}, {pipeline_mode = #tpu.pipeline_mode<synchronous>, transform_indices = @transform_3, window_bounds = array<i64: 128, 128>}, {pipeline_mode = #tpu.pipeline_mode<synchronous>, transform_indices = @transform_4, window_bounds = array<i64: 1, 2304>}, {transform_indices = @transform_5, window_bounds = array<i64: 8, 128>}]} {
    %c0 = arith.constant 0 : index
    %c0_0 = arith.constant 0 : index
    %0 = vector.load %arg5[%c0, %c0_0] : memref<1x2304xf32, #tpu.memory_space<vmem>>, vector<1x2048xf32>
    %c0_1 = arith.constant 0 : index
    %c2048 = arith.constant 2048 : index
    %1 = vector.load %arg5[%c0_1, %c2048] : memref<1x2304xf32, #tpu.memory_space<vmem>>, vector<1x128xf32>
    %c0_2 = arith.constant 0 : index
    %c2176 = arith.constant 2176 : index
    %2 = vector.load %arg5[%c0_2, %c2176] : memref<1x2304xf32, #tpu.memory_space<vmem>>, vector<1x128xf32>
    %c0_3 = arith.constant 0 : index
    %c0_4 = arith.constant 0 : index
    %3 = vector.load %arg1[%c0_3, %c0_4] : memref<8x64xf32, #tpu.memory_space<vmem>>, vector<8x64xf32>
    %4 = arith.truncf %3 : vector<8x64xf32> to vector<8x64xbf16>
    %c0_5 = arith.constant 0 : index
    %c0_6 = arith.constant 0 : index
    %5 = vector.load %arg2[%c0_5, %c0_6] : memref<64x2048xbf16, #tpu.memory_space<vmem>>, vector<64x2048xbf16>
    %cst = arith.constant dense<0.000000e+00> : vector<8x2048xf32>
    %6 = tpu.matmul %4, %5, %cst {dimension_numbers = #tpu.dot_dimension_numbers<[1], [0], [0], [1], [0, 0, 1, 1], [], []>} : vector<8x64xbf16>, vector<64x2048xbf16>, vector<8x2048xf32> -> vector<8x2048xf32>
    %7 = vector.broadcast %0 : vector<1x2048xf32> to vector<8x2048xf32>
    %8 = arith.addf %6, %7 : vector<8x2048xf32>
    %cst_7 = arith.constant 0.00999999977 : f32
    %9 = vector.broadcast %cst_7 : f32 to vector<8x2048xf32>
    %10 = arith.mulf %9, %8 : vector<8x2048xf32>
    %11 = arith.maximumf %8, %10 : vector<8x2048xf32>
    %12 = arith.truncf %11 : vector<8x2048xf32> to vector<8x2048xbf16>
    %c0_8 = arith.constant 0 : index
    %c0_9 = arith.constant 0 : index
    %13 = vector.load %arg3[%c0_8, %c0_9] : memref<2048x128xbf16, #tpu.memory_space<vmem>>, vector<2048x128xbf16>
    %cst_10 = arith.constant dense<0.000000e+00> : vector<8x128xf32>
    %14 = tpu.matmul %12, %13, %cst_10 {dimension_numbers = #tpu.dot_dimension_numbers<[1], [0], [0], [1], [0, 0, 1, 1], [], []>} : vector<8x2048xbf16>, vector<2048x128xbf16>, vector<8x128xf32> -> vector<8x128xf32>
    %15 = vector.broadcast %1 : vector<1x128xf32> to vector<8x128xf32>
    %16 = arith.addf %14, %15 : vector<8x128xf32>
    %cst_11 = arith.constant 0.00999999977 : f32
    %17 = vector.broadcast %cst_11 : f32 to vector<8x128xf32>
    %18 = arith.mulf %17, %16 : vector<8x128xf32>
    %19 = arith.maximumf %16, %18 : vector<8x128xf32>
    %20 = arith.truncf %19 : vector<8x128xf32> to vector<8x128xbf16>
    %c0_12 = arith.constant 0 : index
    %c0_13 = arith.constant 0 : index
    %21 = vector.load %arg4[%c0_12, %c0_13] : memref<128x128xbf16, #tpu.memory_space<vmem>>, vector<128x128xbf16>
    %cst_14 = arith.constant dense<0.000000e+00> : vector<8x128xf32>
    %22 = tpu.matmul %20, %21, %cst_14 {dimension_numbers = #tpu.dot_dimension_numbers<[1], [0], [0], [1], [0, 0, 1, 1], [], []>} : vector<8x128xbf16>, vector<128x128xbf16>, vector<8x128xf32> -> vector<8x128xf32>
    %23 = vector.broadcast %2 : vector<1x128xf32> to vector<8x128xf32>
    %24 = arith.addf %22, %23 : vector<8x128xf32>
    %cst_15 = arith.constant dense<0xFF800000> : vector<8xf32>
    %25 = vector.multi_reduction <maximumf>, %24, %cst_15 [1] : vector<8x128xf32> to vector<8xf32>
    %26 = vector.shape_cast %25 : vector<8xf32> to vector<8x1xf32>
    %27 = vector.broadcast %26 : vector<8x1xf32> to vector<8x128xf32>
    %28 = arith.subf %24, %27 : vector<8x128xf32>
    %29 = math.exp %28 : vector<8x128xf32>
    %cst_16 = arith.constant dense<0.000000e+00> : vector<8xf32>
    %30 = vector.multi_reduction <add>, %29, %cst_16 [1] : vector<8x128xf32> to vector<8xf32>
    %31 = vector.shape_cast %30 : vector<8xf32> to vector<8x1xf32>
    %32 = tpu.reciprocal %31 {approx = true} : vector<8x1xf32> -> vector<8x1xf32>
    %33 = vector.broadcast %32 : vector<8x1xf32> to vector<8x128xf32>
    %34 = arith.mulf %29, %33 : vector<8x128xf32>
    %c0_17 = arith.constant 0 : index
    %c0_18 = arith.constant 0 : index
    %35 = vector.load %arg6[%c0_17, %c0_18] : memref<8x128xf32, #tpu.memory_space<vmem>>, vector<8x128xf32>
    tpu.vector_store %arg6[%c0_17, %c0_18], %34 {strides = array<i32>} : memref<8x128xf32, #tpu.memory_space<vmem>>, vector<8x128xf32>,
    return
  }
  func.func @transform_0(%arg0: i32) -> (i32, i32) {
    %c0_i32 = arith.constant 0 : i32
    %c0_i32_0 = arith.constant 0 : i32
    return %arg0, %c0_i32 : i32, i32
  }
  func.func @transform_1(%arg0: i32) -> (i32, i32) {
    %c0_i32 = arith.constant 0 : i32
    %c0_i32_0 = arith.constant 0 : i32
    %c0_i32_1 = arith.constant 0 : i32
    return %c0_i32, %c0_i32_0 : i32, i32
  }
  func.func @transform_2(%arg0: i32) -> (i32, i32) {
    %c0_i32 = arith.constant 0 : i32
    %c0_i32_0 = arith.constant 0 : i32
    %c0_i32_1 = arith.constant 0 : i32
    return %c0_i32, %c0_i32_0 : i32, i32
  }
  func.func @transform_3(%arg0: i32) -> (i32, i32) {
    %c0_i32 = arith.constant 0 : i32
    %c0_i32_0 = arith.constant 0 : i32
    %c0_i32_1 = arith.constant 0 : i32
    return %c0_i32, %c0_i32_0 : i32, i32
  }
  func.func @transform_4(%arg0: i32) -> (i32, i32) {
    %c0_i32 = arith.constant 0 : i32
    %c0_i32_0 = arith.constant 0 : i32
    %c0_i32_1 = arith.constant 0 : i32
    return %c0_i32, %c0_i32_0 : i32, i32
  }
  func.func @transform_5(%arg0: i32) -> (i32, i32) {
    %c0_i32 = arith.constant 0 : i32
    %c0_i32_0 = arith.constant 0 : i32
    return %arg0, %c0_i32 : i32, i32
  }
}

</mosaic_0001>

<llo_original>
// kernel: tpu_custom_call.1
$region0: #{tpu_custom_call.1}
  #allocation0 [shape = 'u32[]', space=smem, size = 0x4, offset = 0x4, fixed_abs, tag = 'smem constant byte address 0x4 - core index']
  #allocation1 [shape = 'u32[144,128]{1,0:T(1,128)}', space=vmem, size = 0x12000, scoped, tag = 'internal scratch']
  %s0 = inlined_call_operand.hbm [shape: f32[8,64], index: 0, kind: input, shape index: {}]
  %s1 = inlined_call_operand.hbm [shape: bf16[64,2048], index: 1, kind: input, shape index: {}]
  %s2 = inlined_call_operand.hbm [shape: bf16[2048,128], index: 2, kind: input, shape index: {}]
  %s3 = inlined_call_operand.hbm [shape: bf16[128,128], index: 3, kind: input, shape index: {}]
  %s4 = inlined_call_operand.hbm [shape: f32[1,2304], index: 4, kind: input, shape index: {}]
  %s5 = inlined_call_operand.hbm [shape: f32[8,128], index: 5, kind: output, shape index: {}]
  %s6 = sld [smem:[#allocation0]]
  $region50: #{tpu_custom_call.1} parent=0
    _
  %s8 = ssub.s32 1, %s6
  %s9 = scalar_select 0, %s8, %s6
  $region1: #{tpu_custom_call.1} parent=0
    #allocation2 [shape = 'u8[4096]{0}', space=vmem, size = 0x1000, scoped, tag = 'input window, operand 0, single buffered']
    #allocation3 [shape = 's32[1]{0}', space=sflag, size = 0x4, scoped, tag = 'scoped memory for tpu_custom_call.1']
    #allocation4 [shape = 's32[1]{0}', space=sflag, size = 0x4, scoped, tag = 'scoped memory for tpu_custom_call.1']
    #allocation5 [shape = 'u8[262144]{0}', space=vmem, size = 0x40000, scoped, tag = 'input window, operand 1, single buffered']
    #allocation6 [shape = 's32[1]{0}', space=sflag, size = 0x4, scoped, tag = 'scoped memory for tpu_custom_call.1']
    #allocation7 [shape = 'u8[524288]{0}', space=vmem, size = 0x80000, scoped, tag = 'input window, operand 2, single buffered']
    #allocation8 [shape = 'u8[32768]{0}', space=vmem, size = 0x8000, scoped, tag = 'input window, operand 3, single buffered']
    #allocation9 [shape = 's32[1]{0}', space=sflag, size = 0x4, scoped, tag = 'scoped memory for tpu_custom_call.1']
    #allocation10 [shape = 'u8[9216]{0}', space=vmem, size = 0x2400, scoped, tag = 'input window, operand 4, single buffered']
    #allocation11 [shape = 'u8[4096]{0}', space=vmem, size = 0x1000, scoped, tag = 'output window, operand 0, single buffered']
    %10 = vsyncpa [#allocation3], 0
    %11 = vsyncpa [#allocation6], 0
    %12 = vsyncpa [#allocation9], 0
    %13 = vsyncpa [#allocation4], 0
    // Predicated region
    $region2: #{tpu_custom_call.1} parent=1 // pred_check
      _
    $region3: #{tpu_custom_call.1} parent=1 // pred_check_branch
      %15 = sbr.rel (0) target = $region5
    $region4: #{tpu_custom_call.1} parent=1 // pred_region
      %s17 = ssub.s32 128, 128
      %18 = vsyncadd [#allocation3], %s17
      %s20 = sshll.u32 [#allocation2], 4
      %s21 = int_to_ptr.vmem [resolvable:$true] %s20
      %23 = dma.hbm_to_vmem [thread:$0]  %s0, 128, %s21, [#allocation3]
    $region5: #{tpu_custom_call.1} parent=1 // pred_fallthru
      _
    // Predicated region
    $region6: #{tpu_custom_call.1} parent=1 // pred_check
      _
    $region7: #{tpu_custom_call.1} parent=1 // pred_check_branch
      %25 = sbr.rel (0) target = $region9
    $region8: #{tpu_custom_call.1} parent=1 // pred_region
      %s27 = ssub.s32 8192, 8192
      %28 = vsyncadd [#allocation6], %s27
      %s29 = sshll.u32 [#allocation5], 4
      %s30 = int_to_ptr.vmem [resolvable:$true] %s29
      %35 = dma.hbm_to_vmem [thread:$0]  %s1, 8192, %s30, [#allocation6], 1024, 1024, 64
    $region9: #{tpu_custom_call.1} parent=1 // pred_fallthru
      _
    // Predicated region
    $region10: #{tpu_custom_call.1} parent=1 // pred_check
      _
    $region11: #{tpu_custom_call.1} parent=1 // pred_check_branch
      %37 = sbr.rel (0) target = $region13
    $region12: #{tpu_custom_call.1} parent=1 // pred_region
      %s39 = ssub.s32 16384, 16384
      %40 = vsyncadd [#allocation6], %s39
      %s41 = sshll.u32 [#allocation7], 4
      %s42 = int_to_ptr.vmem [resolvable:$true] %s41
      %47 = dma.hbm_to_vmem [thread:$0]  %s2, 16384, %s42, [#allocation6], 64, 64, 4
    $region13: #{tpu_custom_call.1} parent=1 // pred_fallthru
      _
    // Predicated region
    $region14: #{tpu_custom_call.1} parent=1 // pred_check
      _
    $region15: #{tpu_custom_call.1} parent=1 // pred_check_branch
      %49 = sbr.rel (0) target = $region17
    $region16: #{tpu_custom_call.1} parent=1 // pred_region
      %s51 = ssub.s32 1024, 1024
      %52 = vsyncadd [#allocation9], %s51
      %s53 = sshll.u32 [#allocation8], 4
      %s54 = int_to_ptr.vmem [resolvable:$true] %s53
      %59 = dma.hbm_to_vmem [thread:$0]  %s3, 1024, %s54, [#allocation9], 64, 64, 4
    $region17: #{tpu_custom_call.1} parent=1 // pred_fallthru
      _
    // Predicated region
    $region18: #{tpu_custom_call.1} parent=1 // pred_check
      _
    $region19: #{tpu_custom_call.1} parent=1 // pred_check_branch
      %61 = sbr.rel (0) target = $region21
    $region20: #{tpu_custom_call.1} parent=1 // pred_region
      %s63 = ssub.s32 288, 288
      %64 = vsyncadd [#allocation9], %s63
      %s66 = sshll.u32 [#allocation10], 4
      %s67 = int_to_ptr.vmem [resolvable:$true] %s66
      %69 = dma.hbm_to_vmem [thread:$0]  %s4, 288, %s67, [#allocation9]
    $region21: #{tpu_custom_call.1} parent=1 // pred_fallthru
      _
    // Predicated region
    $region22: #{tpu_custom_call.1} parent=1 // pred_check
      _
    $region23: #{tpu_custom_call.1} parent=1 // pred_check_branch
      %71 = sbr.rel (0) target = $region25
    $region24: #{tpu_custom_call.1} parent=1 // pred_region
      %72 = dma.done [#allocation3], 128
    $region25: #{tpu_custom_call.1} parent=1 // pred_fallthru
      _
    // Predicated region
    $region26: #{tpu_custom_call.1} parent=1 // pred_check
      _
    $region27: #{tpu_custom_call.1} parent=1 // pred_check_branch
      %74 = sbr.rel (0) target = $region29
    $region28: #{tpu_custom_call.1} parent=1 // pred_region
      %75 = dma.done [#allocation6], 8192
    $region29: #{tpu_custom_call.1} parent=1 // pred_fallthru
      _
    // Predicated region
    $region30: #{tpu_custom_call.1} parent=1 // pred_check
      _
    $region31: #{tpu_custom_call.1} parent=1 // pred_check_branch
      %77 = sbr.rel (0) target = $region33
    $region32: #{tpu_custom_call.1} parent=1 // pred_region
      %78 = dma.done [#allocation6], 16384
    $region33: #{tpu_custom_call.1} parent=1 // pred_fallthru
      _
    // Predicated region
    $region34: #{tpu_custom_call.1} parent=1 // pred_check
      _
    $region35: #{tpu_custom_call.1} parent=1 // pred_check_branch
      %80 = sbr.rel (0) target = $region37
    $region36: #{tpu_custom_call.1} parent=1 // pred_region
      %81 = dma.done [#allocation9], 1024
    $region37: #{tpu_custom_call.1} parent=1 // pred_fallthru
      _
    // Predicated region
    $region38: #{tpu_custom_call.1} parent=1 // pred_check
      _
    $region39: #{tpu_custom_call.1} parent=1 // pred_check_branch
      %83 = sbr.rel (0) target = $region41
    $region40: #{tpu_custom_call.1} parent=1 // pred_region
      %84 = dma.done [#allocation9], 288
    $region41: #{tpu_custom_call.1} parent=1 // pred_fallthru
      _
    %v86 = vld [vmem:[#allocation10] sm:$0xff]
    %v87 = vld [vmem:[#allocation10 + $0x8] sm:$0xff]
    %v88 = vld [vmem:[#allocation10 + $0x10] sm:$0x1]
    %v89 = vld [vmem:[#allocation10 + $0x11] sm:$0x1]
    %v90 = vld [vmem:[#allocation2] sm:$0xff]
    %v91 = vpack.c.bf16 %v90, %v90
    %v92 = vld [vmem:[#allocation5] sm:$0xff]
    %v93 = vld [vmem:[#allocation5 + $0x8] sm:$0xff]
    %v94 = vld [vmem:[#allocation5 + $0x10] sm:$0xff]
    %v95 = vld [vmem:[#allocation5 + $0x18] sm:$0xff]
    %v96 = vld [vmem:[#allocation5 + $0x20] sm:$0xff]
    %v97 = vld [vmem:[#allocation5 + $0x28] sm:$0xff]
    %v98 = vld [vmem:[#allocation5 + $0x30] sm:$0xff]
    %v99 = vld [vmem:[#allocation5 + $0x38] sm:$0xff]
    %v100 = vld [vmem:[#allocation5 + $0x40] sm:$0xff]
    %v101 = vld [vmem:[#allocation5 + $0x48] sm:$0xff]
    %v102 = vld [vmem:[#allocation5 + $0x50] sm:$0xff]
    %v103 = vld [vmem:[#allocation5 + $0x58] sm:$0xff]
    %v104 = vld [vmem:[#allocation5 + $0x60] sm:$0xff]
    %v105 = vld [vmem:[#allocation5 + $0x68] sm:$0xff]
    %v106 = vld [vmem:[#allocation5 + $0x70] sm:$0xff]
    %v107 = vld [vmem:[#allocation5 + $0x78] sm:$0xff]
    %v108 = vld [vmem:[#allocation5 + $0x80] sm:$0xff]
    %v109 = vld [vmem:[#allocation5 + $0x88] sm:$0xff]
    %v110 = vld [vmem:[#allocation5 + $0x90] sm:$0xff]
    %v111 = vld [vmem:[#allocation5 + $0x98] sm:$0xff]
    %v112 = vld [vmem:[#allocation5 + $0xa0] sm:$0xff]
    %v113 = vld [vmem:[#allocation5 + $0xa8] sm:$0xff]
    %v114 = vld [vmem:[#allocation5 + $0xb0] sm:$0xff]
    %v115 = vld [vmem:[#allocation5 + $0xb8] sm:$0xff]
    %v116 = vld [vmem:[#allocation5 + $0xc0] sm:$0xff]
    %v117 = vld [vmem:[#allocation5 + $0xc8] sm:$0xff]
    %v118 = vld [vmem:[#allocation5 + $0xd0] sm:$0xff]
    %v119 = vld [vmem:[#allocation5 + $0xd8] sm:$0xff]
    %v120 = vld [vmem:[#allocation5 + $0xe0] sm:$0xff]
    %v121 = vld [vmem:[#allocation5 + $0xe8] sm:$0xff]
    %v122 = vld [vmem:[#allocation5 + $0xf0] sm:$0xff]
    %v123 = vld [vmem:[#allocation5 + $0xf8] sm:$0xff]
    %v124 = vld [vmem:[#allocation5 + $0x100] sm:$0xff]
    %v125 = vld [vmem:[#allocation5 + $0x108] sm:$0xff]
    %v126 = vld [vmem:[#allocation5 + $0x110] sm:$0xff]
    %v127 = vld [vmem:[#allocation5 + $0x118] sm:$0xff]
    %v128 = vld [vmem:[#allocation5 + $0x120] sm:$0xff]
    %v129 = vld [vmem:[#allocation5 + $0x128] sm:$0xff]
    %v130 = vld [vmem:[#allocation5 + $0x130] sm:$0xff]
    %v131 = vld [vmem:[#allocation5 + $0x138] sm:$0xff]
    %v132 = vld [vmem:[#allocation5 + $0x140] sm:$0xff]
    %v133 = vld [vmem:[#allocation5 + $0x148] sm:$0xff]
    %v134 = vld [vmem:[#allocation5 + $0x150] sm:$0xff]
    %v135 = vld [vmem:[#allocation5 + $0x158] sm:$0xff]
    %v136 = vld [vmem:[#allocation5 + $0x160] sm:$0xff]
    %v137 = vld [vmem:[#allocation5 + $0x168] sm:$0xff]
    %v138 = vld [vmem:[#allocation5 + $0x170] sm:$0xff]
    %v139 = vld [vmem:[#allocation5 + $0x178] sm:$0xff]
    %v140 = vld [vmem:[#allocation5 + $0x180] sm:$0xff]
    %v141 = vld [vmem:[#allocation5 + $0x188] sm:$0xff]
    %v142 = vld [vmem:[#allocation5 + $0x190] sm:$0xff]
    %v143 = vld [vmem:[#allocation5 + $0x198] sm:$0xff]
    %v144 = vld [vmem:[#allocation5 + $0x1a0] sm:$0xff]
    %v145 = vld [vmem:[#allocation5 + $0x1a8] sm:$0xff]
    %v146 = vld [vmem:[#allocation5 + $0x1b0] sm:$0xff]
    %v147 = vld [vmem:[#allocation5 + $0x1b8] sm:$0xff]
    %v148 = vld [vmem:[#allocation5 + $0x1c0] sm:$0xff]
    %v149 = vld [vmem:[#allocation5 + $0x1c8] sm:$0xff]
    %v150 = vld [vmem:[#allocation5 + $0x1d0] sm:$0xff]
    %v151 = vld [vmem:[#allocation5 + $0x1d8] sm:$0xff]
    %v152 = vld [vmem:[#allocation5 + $0x1e0] sm:$0xff]
    %v153 = vld [vmem:[#allocation5 + $0x1e8] sm:$0xff]
    %v154 = vld [vmem:[#allocation5 + $0x1f0] sm:$0xff]
    %v155 = vld [vmem:[#allocation5 + $0x1f8] sm:$0xff]
    %v158 = vlaneseq
    %v159 = vshrl.u32 %v158, 7
    %v160 = vsub.s32 0, %v159
    %v161 = vrot.slane %v86, %v160
    %v162 = vlaneseq
    %v163 = vshrl.u32 %v162, 7
    %v164 = vsub.s32 1, %v163
    %v165 = vrot.slane %v86, %v164
    %v166 = vlaneseq
    %v167 = vshrl.u32 %v166, 7
    %v168 = vsub.s32 2, %v167
    %v169 = vrot.slane %v86, %v168
    %v170 = vlaneseq
    %v171 = vshrl.u32 %v170, 7
    %v172 = vsub.s32 3, %v171
    %v173 = vrot.slane %v86, %v172
    %v174 = vlaneseq
    %v175 = vshrl.u32 %v174, 7
    %v176 = vsub.s32 4, %v175
    %v177 = vrot.slane %v86, %v176
    %v178 = vlaneseq
    %v179 = vshrl.u32 %v178, 7
    %v180 = vsub.s32 5, %v179
    %v181 = vrot.slane %v86, %v180
    %v182 = vlaneseq
    %v183 = vshrl.u32 %v182, 7
    %v184 = vsub.s32 6, %v183
    %v185 = vrot.slane %v86, %v184
    %v186 = vlaneseq
    %v187 = vshrl.u32 %v186, 7
    %v188 = vsub.s32 7, %v187
    %v189 = vrot.slane %v86, %v188
    %v190 = vlaneseq
    %v191 = vshrl.u32 %v190, 7
    %v192 = vsub.s32 0, %v191
    %v193 = vrot.slane %v87, %v192
    %v194 = vlaneseq
    %v195 = vshrl.u32 %v194, 7
    %v196 = vsub.s32 1, %v195
    %v197 = vrot.slane %v87, %v196
    %v198 = vlaneseq
    %v199 = vshrl.u32 %v198, 7
    %v200 = vsub.s32 2, %v199
    %v201 = vrot.slane %v87, %v200
    %v202 = vlaneseq
    %v203 = vshrl.u32 %v202, 7
    %v204 = vsub.s32 3, %v203
    %v205 = vrot.slane %v87, %v204
    %v206 = vlaneseq
    %v207 = vshrl.u32 %v206, 7
    %v208 = vsub.s32 4, %v207
    %v209 = vrot.slane %v87, %v208
    %v210 = vlaneseq
    %v211 = vshrl.u32 %v210, 7
    %v212 = vsub.s32 5, %v211
    %v213 = vrot.slane %v87, %v212
    %v214 = vlaneseq
    %v215 = vshrl.u32 %v214, 7
    %v216 = vsub.s32 6, %v215
    %v217 = vrot.slane %v87, %v216
    %v218 = vlaneseq
    %v219 = vshrl.u32 %v218, 7
    %v220 = vsub.s32 7, %v219
    %v221 = vrot.slane %v87, %v220
    %v302 = vunpack.c.l.b16 %v92
    %v303 = vunpack.c.h.b16 %v92
    %v304 = vunpack.c.l.b16 %v93
    %v305 = vunpack.c.h.b16 %v93
    %v306 = vunpack.c.l.b16 %v94
    %v307 = vunpack.c.h.b16 %v94
    %v308 = vunpack.c.l.b16 %v95
    %v309 = vunpack.c.h.b16 %v95
    %v310 = vunpack.c.l.b16 %v96
    %v311 = vunpack.c.h.b16 %v96
    %v312 = vunpack.c.l.b16 %v97
    %v313 = vunpack.c.h.b16 %v97
    %v314 = vunpack.c.l.b16 %v98
    %v315 = vunpack.c.h.b16 %v98
    %v316 = vunpack.c.l.b16 %v99
    %v317 = vunpack.c.h.b16 %v99
    %v318 = vunpack.c.l.b16 %v100
    %v319 = vunpack.c.h.b16 %v100
    %v320 = vunpack.c.l.b16 %v101
    %v321 = vunpack.c.h.b16 %v101
    %v322 = vunpack.c.l.b16 %v102
    %v323 = vunpack.c.h.b16 %v102
    %v324 = vunpack.c.l.b16 %v103
    %v325 = vunpack.c.h.b16 %v103
    %v326 = vunpack.c.l.b16 %v104
    %v327 = vunpack.c.h.b16 %v104
    %v328 = vunpack.c.l.b16 %v105
    %v329 = vunpack.c.h.b16 %v105
    %v330 = vunpack.c.l.b16 %v106
    %v331 = vunpack.c.h.b16 %v106
    %v332 = vunpack.c.l.b16 %v107
    %v333 = vunpack.c.h.b16 %v107
    %v334 = vunpack.c.l.b16 %v108
    %v335 = vunpack.c.h.b16 %v108
    %v336 = vunpack.c.l.b16 %v109
    %v337 = vunpack.c.h.b16 %v109
    %v338 = vunpack.c.l.b16 %v110
    %v339 = vunpack.c.h.b16 %v110
    %v340 = vunpack.c.l.b16 %v111
    %v341 = vunpack.c.h.b16 %v111
    %v342 = vunpack.c.l.b16 %v112
    %v343 = vunpack.c.h.b16 %v112
    %v344 = vunpack.c.l.b16 %v113
    %v345 = vunpack.c.h.b16 %v113
    %v346 = vunpack.c.l.b16 %v114
    %v347 = vunpack.c.h.b16 %v114
    %v348 = vunpack.c.l.b16 %v115
    %v349 = vunpack.c.h.b16 %v115
    %v350 = vunpack.c.l.b16 %v116
    %v351 = vunpack.c.h.b16 %v116
    %v352 = vunpack.c.l.b16 %v117
    %v353 = vunpack.c.h.b16 %v117
    %v354 = vunpack.c.l.b16 %v118
    %v355 = vunpack.c.h.b16 %v118
    %v356 = vunpack.c.l.b16 %v119
    %v357 = vunpack.c.h.b16 %v119
    %v358 = vunpack.c.l.b16 %v120
    %v359 = vunpack.c.h.b16 %v120
    %v360 = vunpack.c.l.b16 %v121
    %v361 = vunpack.c.h.b16 %v121
    %v362 = vunpack.c.l.b16 %v122
    %v363 = vunpack.c.h.b16 %v122
    %v364 = vunpack.c.l.b16 %v123
    %v365 = vunpack.c.h.b16 %v123
    %v366 = vunpack.c.l.b16 %v124
    %v367 = vunpack.c.h.b16 %v124
    %v368 = vunpack.c.l.b16 %v125
    %v369 = vunpack.c.h.b16 %v125
    %v370 = vunpack.c.l.b16 %v126
    %v371 = vunpack.c.h.b16 %v126
    %v372 = vunpack.c.l.b16 %v127
    %v373 = vunpack.c.h.b16 %v127
    %v374 = vunpack.c.l.b16 %v128
    %v375 = vunpack.c.h.b16 %v128
    %v376 = vunpack.c.l.b16 %v129
    %v377 = vunpack.c.h.b16 %v129
    %v378 = vunpack.c.l.b16 %v130
    %v379 = vunpack.c.h.b16 %v130
    %v380 = vunpack.c.l.b16 %v131
    %v381 = vunpack.c.h.b16 %v131
    %v382 = vunpack.c.l.b16 %v132
    %v383 = vunpack.c.h.b16 %v132
    %v384 = vunpack.c.l.b16 %v133
    %v385 = vunpack.c.h.b16 %v133
    %v386 = vunpack.c.l.b16 %v134
    %v387 = vunpack.c.h.b16 %v134
    %v388 = vunpack.c.l.b16 %v135
    %v389 = vunpack.c.h.b16 %v135
    %v390 = vunpack.c.l.b16 %v136
    %v391 = vunpack.c.h.b16 %v136
    %v392 = vunpack.c.l.b16 %v137
    %v393 = vunpack.c.h.b16 %v137
    %v394 = vunpack.c.l.b16 %v138
    %v395 = vunpack.c.h.b16 %v138
    %v396 = vunpack.c.l.b16 %v139
    %v397 = vunpack.c.h.b16 %v139
    %v398 = vunpack.c.l.b16 %v140
    %v399 = vunpack.c.h.b16 %v140
    %v400 = vunpack.c.l.b16 %v141
    %v401 = vunpack.c.h.b16 %v141
    %v402 = vunpack.c.l.b16 %v142
    %v403 = vunpack.c.h.b16 %v142
    %v404 = vunpack.c.l.b16 %v143
    %v405 = vunpack.c.h.b16 %v143
    %v406 = vunpack.c.l.b16 %v144
    %v407 = vunpack.c.h.b16 %v144
    %v408 = vunpack.c.l.b16 %v145
    %v409 = vunpack.c.h.b16 %v145
    %v410 = vunpack.c.l.b16 %v146
    %v411 = vunpack.c.h.b16 %v146
    %v412 = vunpack.c.l.b16 %v147
    %v413 = vunpack.c.h.b16 %v147
    %v414 = vunpack.c.l.b16 %v148
    %v415 = vunpack.c.h.b16 %v148
    %v416 = vunpack.c.l.b16 %v149
    %v417 = vunpack.c.h.b16 %v149
    %v418 = vunpack.c.l.b16 %v150
    %v419 = vunpack.c.h.b16 %v150
    %v420 = vunpack.c.l.b16 %v151
    %v421 = vunpack.c.h.b16 %v151
    %v422 = vunpack.c.l.b16 %v152
    %v423 = vunpack.c.h.b16 %v152
    %v424 = vunpack.c.l.b16 %v153
    %v425 = vunpack.c.h.b16 %v153
    %v426 = vunpack.c.l.b16 %v154
    %v427 = vunpack.c.h.b16 %v154
    %v428 = vunpack.c.l.b16 %v155
    %v429 = vunpack.c.h.b16 %v155
    %v430 = vpack.c.b16 %v318, %v302
    %v431 = vpack.c.b16 %v319, %v303
    %v432 = vpack.c.b16 %v320, %v304
    %v433 = vpack.c.b16 %v321, %v305
    %v434 = vpack.c.b16 %v322, %v306
    %v435 = vpack.c.b16 %v323, %v307
    %v436 = vpack.c.b16 %v324, %v308
    %v437 = vpack.c.b16 %v325, %v309
    %v438 = vpack.c.b16 %v326, %v310
    %v439 = vpack.c.b16 %v327, %v311
    %v440 = vpack.c.b16 %v328, %v312
    %v441 = vpack.c.b16 %v329, %v313
    %v442 = vpack.c.b16 %v330, %v314
    %v443 = vpack.c.b16 %v331, %v315
    %v444 = vpack.c.b16 %v332, %v316
    %v445 = vpack.c.b16 %v333, %v317
    %v446 = vpack.c.b16 %v350, %v334
    %v447 = vpack.c.b16 %v351, %v335
    %v448 = vpack.c.b16 %v352, %v336
    %v449 = vpack.c.b16 %v353, %v337
    %v450 = vpack.c.b16 %v354, %v338
    %v451 = vpack.c.b16 %v355, %v339
    %v452 = vpack.c.b16 %v356, %v340
    %v453 = vpack.c.b16 %v357, %v341
    %v454 = vpack.c.b16 %v358, %v342
    %v455 = vpack.c.b16 %v359, %v343
    %v456 = vpack.c.b16 %v360, %v344
    %v457 = vpack.c.b16 %v361, %v345
    %v458 = vpack.c.b16 %v362, %v346
    %v459 = vpack.c.b16 %v363, %v347
    %v460 = vpack.c.b16 %v364, %v348
    %v461 = vpack.c.b16 %v365, %v349
    %v462 = vpack.c.b16 %v382, %v366
    %v463 = vpack.c.b16 %v383, %v367
    %v464 = vpack.c.b16 %v384, %v368
    %v465 = vpack.c.b16 %v385, %v369
    %v466 = vpack.c.b16 %v386, %v370
    %v467 = vpack.c.b16 %v387, %v371
    %v468 = vpack.c.b16 %v388, %v372
    %v469 = vpack.c.b16 %v389, %v373
    %v470 = vpack.c.b16 %v390, %v374
    %v471 = vpack.c.b16 %v391, %v375
    %v472 = vpack.c.b16 %v392, %v376
    %v473 = vpack.c.b16 %v393, %v377
    %v474 = vpack.c.b16 %v394, %v378
    %v475 = vpack.c.b16 %v395, %v379
    %v476 = vpack.c.b16 %v396, %v380
    %v477 = vpack.c.b16 %v397, %v381
    %v478 = vpack.c.b16 %v414, %v398
    %v479 = vpack.c.b16 %v415, %v399
    %v480 = vpack.c.b16 %v416, %v400
    %v481 = vpack.c.b16 %v417, %v401
    %v482 = vpack.c.b16 %v418, %v402
    %v483 = vpack.c.b16 %v419, %v403
    %v484 = vpack.c.b16 %v420, %v404
    %v485 = vpack.c.b16 %v421, %v405
    %v486 = vpack.c.b16 %v422, %v406
    %v487 = vpack.c.b16 %v423, %v407
    %v488 = vpack.c.b16 %v424, %v408
    %v489 = vpack.c.b16 %v425, %v409
    %v490 = vpack.c.b16 %v426, %v410
    %v491 = vpack.c.b16 %v427, %v411
    %v492 = vpack.c.b16 %v428, %v412
    %v493 = vpack.c.b16 %v429, %v413
    %vm558 = vcmask 523264
    %v560 = vsel %vm558, %v91, 0
    %562 = vmatprep.subr.bf16.mxu0 0
    %563 = vmatpush1.bf16.msra.mxu0 0
    %564 = vmatprep.subr.bf16.mxu0 0
    %565 = vmatpush1.bf16.msra.mxu0 0
    %566 = vmatprep.subr.bf16.mxu0 0
    %567 = vmatpush1.bf16.msra.mxu0 0
    %568 = vmatprep.subr.bf16.mxu0 0
    %569 = vmatpush1.bf16.msra.mxu0 0
    %570 = vmatprep.subr.bf16.mxu0 %v479
    %571 = vmatpush1.bf16.msra.mxu0 %v478
    %572 = vmatprep.subr.bf16.mxu0 %v463
    %573 = vmatpush1.bf16.msra.mxu0 %v462
    %574 = vmatprep.subr.bf16.mxu0 %v447
    %575 = vmatpush1.bf16.msra.mxu0 %v446
    %576 = vmatprep.subr.bf16.mxu0 %v431
    %577 = vmatpush1.bf16.msra.mxu0 %v430
    %578 = vmatprep.subr.bf16.mxu0 0
    %579 = vmatpush2.bf16.msra.mxu0 0
    %580 = vmatprep.subr.bf16.mxu0 0
    %581 = vmatpush2.bf16.msra.mxu0 0
    %582 = vmatprep.subr.bf16.mxu0 0
    %583 = vmatpush2.bf16.msra.mxu0 0
    %584 = vmatprep.subr.bf16.mxu0 0
    %585 = vmatpush2.bf16.msra.mxu0 0
    %586 = vmatprep.subr.bf16.mxu0 0
    %587 = vmatpush2.bf16.msra.mxu0 0
    %588 = vmatprep.subr.bf16.mxu0 0
    %589 = vmatpush2.bf16.msra.mxu0 0
    %590 = vmatprep.subr.bf16.mxu0 0
    %591 = vmatpush2.bf16.msra.mxu0 0
    %592 = vmatprep.subr.bf16.mxu0 0
    %593 = vmatpush2.bf16.msra.mxu0 0
    %594 = vmatprep.mubr.bf16.mxu0 0
    %595 = vmatmul.mubr.bf16.gmra.mxu0 %v560
    %v596 = vpop.f32.mrf.mxu0
    %v597 = vadd.f32 %v161, %v596
    %v598 = vpop.f32.mrf.mxu0
    %v599 = vadd.f32 %v165, %v598
    %v600 = vpop.f32.mrf.mxu0
    %v601 = vpop.f32.mrf.mxu0
    %602 = vdwg.mxu0
    %603 = vmatprep.subr.bf16.mxu0 0
    %604 = vmatpush1.bf16.msra.mxu0 0
    %605 = vmatprep.subr.bf16.mxu0 0
    %606 = vmatpush1.bf16.msra.mxu0 0
    %607 = vmatprep.subr.bf16.mxu0 0
    %608 = vmatpush1.bf16.msra.mxu0 0
    %609 = vmatprep.subr.bf16.mxu0 0
    %610 = vmatpush1.bf16.msra.mxu0 0
    %611 = vmatprep.subr.bf16.mxu0 %v481
    %612 = vmatpush1.bf16.msra.mxu0 %v480
    %613 = vmatprep.subr.bf16.mxu0 %v465
    %614 = vmatpush1.bf16.msra.mxu0 %v464
    %615 = vmatprep.subr.bf16.mxu0 %v449
    %616 = vmatpush1.bf16.msra.mxu0 %v448
    %617 = vmatprep.subr.bf16.mxu0 %v433
    %618 = vmatpush1.bf16.msra.mxu0 %v432
    %619 = vmatprep.subr.bf16.mxu0 0
    %620 = vmatpush2.bf16.msra.mxu0 0
    %621 = vmatprep.subr.bf16.mxu0 0
    %622 = vmatpush2.bf16.msra.mxu0 0
    %623 = vmatprep.subr.bf16.mxu0 0
    %624 = vmatpush2.bf16.msra.mxu0 0
    %625 = vmatprep.subr.bf16.mxu0 0
    %626 = vmatpush2.bf16.msra.mxu0 0
    %627 = vmatprep.subr.bf16.mxu0 0
    %628 = vmatpush2.bf16.msra.mxu0 0
    %629 = vmatprep.subr.bf16.mxu0 0
    %630 = vmatpush2.bf16.msra.mxu0 0
    %631 = vmatprep.subr.bf16.mxu0 0
    %632 = vmatpush2.bf16.msra.mxu0 0
    %633 = vmatprep.subr.bf16.mxu0 0
    %634 = vmatpush2.bf16.msra.mxu0 0
    %635 = vmatprep.mubr.bf16.mxu0 0
    %636 = vmatmul.mubr.bf16.gmra.mxu0 %v560
    %v637 = vpop.f32.mrf.mxu0
    %v638 = vadd.f32 %v169, %v637
    %v639 = vpop.f32.mrf.mxu0
    %v640 = vadd.f32 %v173, %v639
    %v641 = vpop.f32.mrf.mxu0
    %v642 = vpop.f32.mrf.mxu0
    %643 = vdwg.mxu0
    %644 = vmatprep.subr.bf16.mxu0 0
    %645 = vmatpush1.bf16.msra.mxu0 0
    %646 = vmatprep.subr.bf16.mxu0 0
    %647 = vmatpush1.bf16.msra.mxu0 0
    %648 = vmatprep.subr.bf16.mxu0 0
    %649 = vmatpush1.bf16.msra.mxu0 0
    %650 = vmatprep.subr.bf16.mxu0 0
    %651 = vmatpush1.bf16.msra.mxu0 0
    %652 = vmatprep.subr.bf16.mxu0 %v483
    %653 = vmatpush1.bf16.msra.mxu0 %v482
    %654 = vmatprep.subr.bf16.mxu0 %v467
    %655 = vmatpush1.bf16.msra.mxu0 %v466
    %656 = vmatprep.subr.bf16.mxu0 %v451
    %657 = vmatpush1.bf16.msra.mxu0 %v450
    %658 = vmatprep.subr.bf16.mxu0 %v435
    %659 = vmatpush1.bf16.msra.mxu0 %v434
    %660 = vmatprep.subr.bf16.mxu0 0
    %661 = vmatpush2.bf16.msra.mxu0 0
    %662 = vmatprep.subr.bf16.mxu0 0
    %663 = vmatpush2.bf16.msra.mxu0 0
    %664 = vmatprep.subr.bf16.mxu0 0
    %665 = vmatpush2.bf16.msra.mxu0 0
    %666 = vmatprep.subr.bf16.mxu0 0
    %667 = vmatpush2.bf16.msra.mxu0 0
    %668 = vmatprep.subr.bf16.mxu0 0
    %669 = vmatpush2.bf16.msra.mxu0 0
    %670 = vmatprep.subr.bf16.mxu0 0
    %671 = vmatpush2.bf16.msra.mxu0 0
    %672 = vmatprep.subr.bf16.mxu0 0
    %673 = vmatpush2.bf16.msra.mxu0 0
    %674 = vmatprep.subr.bf16.mxu0 0
    %675 = vmatpush2.bf16.msra.mxu0 0
    %676 = vmatprep.mubr.bf16.mxu0 0
    %677 = vmatmul.mubr.bf16.gmra.mxu0 %v560
    %v678 = vpop.f32.mrf.mxu0
    %v679 = vadd.f32 %v177, %v678
    %v680 = vpop.f32.mrf.mxu0
    %v681 = vadd.f32 %v181, %v680
    %v682 = vpop.f32.mrf.mxu0
    %v683 = vpop.f32.mrf.mxu0
    %684 = vdwg.mxu0
    %685 = vmatprep.subr.bf16.mxu0 0
    %686 = vmatpush1.bf16.msra.mxu0 0
    %687 = vmatprep.subr.bf16.mxu0 0
    %688 = vmatpush1.bf16.msra.mxu0 0
    %689 = vmatprep.subr.bf16.mxu0 0
    %690 = vmatpush1.bf16.msra.mxu0 0
    %691 = vmatprep.subr.bf16.mxu0 0
    %692 = vmatpush1.bf16.msra.mxu0 0
    %693 = vmatprep.subr.bf16.mxu0 %v485
    %694 = vmatpush1.bf16.msra.mxu0 %v484
    %695 = vmatprep.subr.bf16.mxu0 %v469
    %696 = vmatpush1.bf16.msra.mxu0 %v468
    %697 = vmatprep.subr.bf16.mxu0 %v453
    %698 = vmatpush1.bf16.msra.mxu0 %v452
    %699 = vmatprep.subr.bf16.mxu0 %v437
    %700 = vmatpush1.bf16.msra.mxu0 %v436
    %701 = vmatprep.subr.bf16.mxu0 0
    %702 = vmatpush2.bf16.msra.mxu0 0
    %703 = vmatprep.subr.bf16.mxu0 0
    %704 = vmatpush2.bf16.msra.mxu0 0
    %705 = vmatprep.subr.bf16.mxu0 0
    %706 = vmatpush2.bf16.msra.mxu0 0
    %707 = vmatprep.subr.bf16.mxu0 0
    %708 = vmatpush2.bf16.msra.mxu0 0
    %709 = vmatprep.subr.bf16.mxu0 0
    %710 = vmatpush2.bf16.msra.mxu0 0
    %711 = vmatprep.subr.bf16.mxu0 0
    %712 = vmatpush2.bf16.msra.mxu0 0
    %713 = vmatprep.subr.bf16.mxu0 0
    %714 = vmatpush2.bf16.msra.mxu0 0
    %715 = vmatprep.subr.bf16.mxu0 0
    %716 = vmatpush2.bf16.msra.mxu0 0
    %717 = vmatprep.mubr.bf16.mxu0 0
    %718 = vmatmul.mubr.bf16.gmra.mxu0 %v560
    %v719 = vpop.f32.mrf.mxu0
    %v720 = vadd.f32 %v185, %v719
    %v721 = vpop.f32.mrf.mxu0
    %v722 = vadd.f32 %v189, %v721
    %v723 = vpop.f32.mrf.mxu0
    %v724 = vpop.f32.mrf.mxu0
    %725 = vdwg.mxu0
    %726 = vmatprep.subr.bf16.mxu0 0
    %727 = vmatpush1.bf16.msra.mxu0 0
    %728 = vmatprep.subr.bf16.mxu0 0
    %729 = vmatpush1.bf16.msra.mxu0 0
    %730 = vmatprep.subr.bf16.mxu0 0
    %731 = vmatpush1.bf16.msra.mxu0 0
    %732 = vmatprep.subr.bf16.mxu0 0
    %733 = vmatpush1.bf16.msra.mxu0 0
    %734 = vmatprep.subr.bf16.mxu0 %v487
    %735 = vmatpush1.bf16.msra.mxu0 %v486
    %736 = vmatprep.subr.bf16.mxu0 %v471
    %737 = vmatpush1.bf16.msra.mxu0 %v470
    %738 = vmatprep.subr.bf16.mxu0 %v455
    %739 = vmatpush1.bf16.msra.mxu0 %v454
    %740 = vmatprep.subr.bf16.mxu0 %v439
    %741 = vmatpush1.bf16.msra.mxu0 %v438
    %742 = vmatprep.subr.bf16.mxu0 0
    %743 = vmatpush2.bf16.msra.mxu0 0
    %744 = vmatprep.subr.bf16.mxu0 0
    %745 = vmatpush2.bf16.msra.mxu0 0
    %746 = vmatprep.subr.bf16.mxu0 0
    %747 = vmatpush2.bf16.msra.mxu0 0
    %748 = vmatprep.subr.bf16.mxu0 0
    %749 = vmatpush2.bf16.msra.mxu0 0
    %750 = vmatprep.subr.bf16.mxu0 0
    %751 = vmatpush2.bf16.msra.mxu0 0
    %752 = vmatprep.subr.bf16.mxu0 0
    %753 = vmatpush2.bf16.msra.mxu0 0
    %754 = vmatprep.subr.bf16.mxu0 0
    %755 = vmatpush2.bf16.msra.mxu0 0
    %756 = vmatprep.subr.bf16.mxu0 0
    %757 = vmatpush2.bf16.msra.mxu0 0
    %758 = vmatprep.mubr.bf16.mxu0 0
    %759 = vmatmul.mubr.bf16.gmra.mxu0 %v560
    %v760 = vpop.f32.mrf.mxu0
    %v761 = vadd.f32 %v193, %v760
    %v762 = vpop.f32.mrf.mxu0
    %v763 = vadd.f32 %v197, %v762
    %v764 = vpop.f32.mrf.mxu0
    %v765 = vpop.f32.mrf.mxu0
    %766 = vdwg.mxu0
    %767 = vmatprep.subr.bf16.mxu0 0
    %768 = vmatpush1.bf16.msra.mxu0 0
    %769 = vmatprep.subr.bf16.mxu0 0
    %770 = vmatpush1.bf16.msra.mxu0 0
    %771 = vmatprep.subr.bf16.mxu0 0
    %772 = vmatpush1.bf16.msra.mxu0 0
    %773 = vmatprep.subr.bf16.mxu0 0
    %774 = vmatpush1.bf16.msra.mxu0 0
    %775 = vmatprep.subr.bf16.mxu0 %v489
    %776 = vmatpush1.bf16.msra.mxu0 %v488
    %777 = vmatprep.subr.bf16.mxu0 %v473
    %778 = vmatpush1.bf16.msra.mxu0 %v472
    %779 = vmatprep.subr.bf16.mxu0 %v457
    %780 = vmatpush1.bf16.msra.mxu0 %v456
    %781 = vmatprep.subr.bf16.mxu0 %v441
    %782 = vmatpush1.bf16.msra.mxu0 %v440
    %783 = vmatprep.subr.bf16.mxu0 0
    %784 = vmatpush2.bf16.msra.mxu0 0
    %785 = vmatprep.subr.bf16.mxu0 0
    %786 = vmatpush2.bf16.msra.mxu0 0
    %787 = vmatprep.subr.bf16.mxu0 0
    %788 = vmatpush2.bf16.msra.mxu0 0
    %789 = vmatprep.subr.bf16.mxu0 0
    %790 = vmatpush2.bf16.msra.mxu0 0
    %791 = vmatprep.subr.bf16.mxu0 0
    %792 = vmatpush2.bf16.msra.mxu0 0
    %793 = vmatprep.subr.bf16.mxu0 0
    %794 = vmatpush2.bf16.msra.mxu0 0
    %795 = vmatprep.subr.bf16.mxu0 0
    %796 = vmatpush2.bf16.msra.mxu0 0
    %797 = vmatprep.subr.bf16.mxu0 0
    %798 = vmatpush2.bf16.msra.mxu0 0
    %799 = vmatprep.mubr.bf16.mxu0 0
    %800 = vmatmul.mubr.bf16.gmra.mxu0 %v560
    %v801 = vpop.f32.mrf.mxu0
    %v802 = vadd.f32 %v201, %v801
    %v803 = vpop.f32.mrf.mxu0
    %v804 = vadd.f32 %v205, %v803
    %v805 = vpop.f32.mrf.mxu0
    %v806 = vpop.f32.mrf.mxu0
    %807 = vdwg.mxu0
    %808 = vmatprep.subr.bf16.mxu0 0
    %809 = vmatpush1.bf16.msra.mxu0 0
    %810 = vmatprep.subr.bf16.mxu0 0
    %811 = vmatpush1.bf16.msra.mxu0 0
    %812 = vmatprep.subr.bf16.mxu0 0
    %813 = vmatpush1.bf16.msra.mxu0 0
    %814 = vmatprep.subr.bf16.mxu0 0
    %815 = vmatpush1.bf16.msra.mxu0 0
    %816 = vmatprep.subr.bf16.mxu0 %v491
    %817 = vmatpush1.bf16.msra.mxu0 %v490
    %818 = vmatprep.subr.bf16.mxu0 %v475
    %819 = vmatpush1.bf16.msra.mxu0 %v474
    %820 = vmatprep.subr.bf16.mxu0 %v459
    %821 = vmatpush1.bf16.msra.mxu0 %v458
    %822 = vmatprep.subr.bf16.mxu0 %v443
    %823 = vmatpush1.bf16.msra.mxu0 %v442
    %824 = vmatprep.subr.bf16.mxu0 0
    %825 = vmatpush2.bf16.msra.mxu0 0
    %826 = vmatprep.subr.bf16.mxu0 0
    %827 = vmatpush2.bf16.msra.mxu0 0
    %828 = vmatprep.subr.bf16.mxu0 0
    %829 = vmatpush2.bf16.msra.mxu0 0
    %830 = vmatprep.subr.bf16.mxu0 0
    %831 = vmatpush2.bf16.msra.mxu0 0
    %832 = vmatprep.subr.bf16.mxu0 0
    %833 = vmatpush2.bf16.msra.mxu0 0
    %834 = vmatprep.subr.bf16.mxu0 0
    %835 = vmatpush2.bf16.msra.mxu0 0
    %836 = vmatprep.subr.bf16.mxu0 0
    %837 = vmatpush2.bf16.msra.mxu0 0
    %838 = vmatprep.subr.bf16.mxu0 0
    %839 = vmatpush2.bf16.msra.mxu0 0
    %840 = vmatprep.mubr.bf16.mxu0 0
    %841 = vmatmul.mubr.bf16.gmra.mxu0 %v560
    %v842 = vpop.f32.mrf.mxu0
    %v843 = vadd.f32 %v209, %v842
    %v844 = vpop.f32.mrf.mxu0
    %v845 = vadd.f32 %v213, %v844
    %v846 = vpop.f32.mrf.mxu0
    %v847 = vpop.f32.mrf.mxu0
    %848 = vdwg.mxu0
    %849 = vmatprep.subr.bf16.mxu0 0
    %850 = vmatpush1.bf16.msra.mxu0 0
    %851 = vmatprep.subr.bf16.mxu0 0
    %852 = vmatpush1.bf16.msra.mxu0 0
    %853 = vmatprep.subr.bf16.mxu0 0
    %854 = vmatpush1.bf16.msra.mxu0 0
    %855 = vmatprep.subr.bf16.mxu0 0
    %856 = vmatpush1.bf16.msra.mxu0 0
    %857 = vmatprep.subr.bf16.mxu0 %v493
    %858 = vmatpush1.bf16.msra.mxu0 %v492
    %859 = vmatprep.subr.bf16.mxu0 %v477
    %860 = vmatpush1.bf16.msra.mxu0 %v476
    %861 = vmatprep.subr.bf16.mxu0 %v461
    %862 = vmatpush1.bf16.msra.mxu0 %v460
    %863 = vmatprep.subr.bf16.mxu0 %v445
    %864 = vmatpush1.bf16.msra.mxu0 %v444
    %865 = vmatprep.subr.bf16.mxu0 0
    %866 = vmatpush2.bf16.msra.mxu0 0
    %867 = vmatprep.subr.bf16.mxu0 0
    %868 = vmatpush2.bf16.msra.mxu0 0
    %869 = vmatprep.subr.bf16.mxu0 0
    %870 = vmatpush2.bf16.msra.mxu0 0
    %871 = vmatprep.subr.bf16.mxu0 0
    %872 = vmatpush2.bf16.msra.mxu0 0
    %873 = vmatprep.subr.bf16.mxu0 0
    %874 = vmatpush2.bf16.msra.mxu0 0
    %875 = vmatprep.subr.bf16.mxu0 0
    %876 = vmatpush2.bf16.msra.mxu0 0
    %877 = vmatprep.subr.bf16.mxu0 0
    %878 = vmatpush2.bf16.msra.mxu0 0
    %879 = vmatprep.subr.bf16.mxu0 0
    %880 = vmatpush2.bf16.msra.mxu0 0
    %881 = vmatprep.mubr.bf16.mxu0 0
    %882 = vmatmul.mubr.bf16.gmra.mxu0 %v560
    %v883 = vpop.f32.mrf.mxu0
    %v884 = vadd.f32 %v217, %v883
    %v885 = vpop.f32.mrf.mxu0
    %v886 = vadd.f32 %v221, %v885
    %v887 = vpop.f32.mrf.mxu0
    %v888 = vpop.f32.mrf.mxu0
    %889 = vdwg.mxu0
    %v890 = vmul.f32 %v597, 0.01
    %v891 = vmul.f32 %v599, 0.01
    %v892 = vmul.f32 %v638, 0.01
    %v893 = vmul.f32 %v640, 0.01
    %v894 = vmul.f32 %v679, 0.01
    %v895 = vmul.f32 %v681, 0.01
    %v896 = vmul.f32 %v720, 0.01
    %v897 = vmul.f32 %v722, 0.01
    %v898 = vmul.f32 %v761, 0.01
    %v899 = vmul.f32 %v763, 0.01
    %v900 = vmul.f32 %v802, 0.01
    %v901 = vmul.f32 %v804, 0.01
    %v902 = vmul.f32 %v843, 0.01
    %v903 = vmul.f32 %v845, 0.01
    %v904 = vmul.f32 %v884, 0.01
    %v905 = vmul.f32 %v886, 0.01
    %v906 = vmax.f32 %v597, %v890
    %v907 = vmax.f32 %v599, %v891
    %v908 = vmax.f32 %v638, %v892
    %v909 = vmax.f32 %v640, %v893
    %v910 = vmax.f32 %v679, %v894
    %v911 = vmax.f32 %v681, %v895
    %v912 = vmax.f32 %v720, %v896
    %v913 = vmax.f32 %v722, %v897
    %v914 = vmax.f32 %v761, %v898
    %v915 = vmax.f32 %v763, %v899
    %v916 = vmax.f32 %v802, %v900
    %v917 = vmax.f32 %v804, %v901
    %v918 = vmax.f32 %v843, %v902
    %v919 = vmax.f32 %v845, %v903
    %v920 = vmax.f32 %v884, %v904
    %v921 = vmax.f32 %v886, %v905
    %v922 = vpack.c.bf16 %v906, %v906
    %v923 = vpack.c.bf16 %v907, %v907
    %v924 = vpack.c.bf16 %v908, %v908
    %v925 = vpack.c.bf16 %v909, %v909
    %v926 = vpack.c.bf16 %v910, %v910
    %v927 = vpack.c.bf16 %v911, %v911
    %v928 = vpack.c.bf16 %v912, %v912
    %v929 = vpack.c.bf16 %v913, %v913
    %v930 = vpack.c.bf16 %v914, %v914
    %v931 = vpack.c.bf16 %v915, %v915
    %v932 = vpack.c.bf16 %v916, %v916
    %v933 = vpack.c.bf16 %v917, %v917
    %v934 = vpack.c.bf16 %v918, %v918
    %v935 = vpack.c.bf16 %v919, %v919
    %v936 = vpack.c.bf16 %v920, %v920
    %v937 = vpack.c.bf16 %v921, %v921
    %v938 = vld [vmem:[#allocation7] sm:$0xf]
    %v939 = vld [vmem:[#allocation7 + $0x4] sm:$0xf]
    %v940 = vld [vmem:[#allocation7 + $0x8] sm:$0xf]
    %v941 = vld [vmem:[#allocation7 + $0xc] sm:$0xf]
    %v942 = vld [vmem:[#allocation7 + $0x10] sm:$0xf]
    %v943 = vld [vmem:[#allocation7 + $0x14] sm:$0xf]
    %v944 = vld [vmem:[#allocation7 + $0x18] sm:$0xf]
    %v945 = vld [vmem:[#allocation7 + $0x1c] sm:$0xf]
    %v946 = vld [vmem:[#allocation7 + $0x20] sm:$0xf]
    %v947 = vld [vmem:[#allocation7 + $0x24] sm:$0xf]
    %v948 = vld [vmem:[#allocation7 + $0x28] sm:$0xf]
    %v949 = vld [vmem:[#allocation7 + $0x2c] sm:$0xf]
    %v950 = vld [vmem:[#allocation7 + $0x30] sm:$0xf]
    %v951 = vld [vmem:[#allocation7 + $0x34] sm:$0xf]
    %v952 = vld [vmem:[#allocation7 + $0x38] sm:$0xf]
    %v953 = vld [vmem:[#allocation7 + $0x3c] sm:$0xf]
    %v954 = vld [vmem:[#allocation7 + $0x40] sm:$0xf]
    %v955 = vld [vmem:[#allocation7 + $0x44] sm:$0xf]
    %v956 = vld [vmem:[#allocation7 + $0x48] sm:$0xf]
    %v957 = vld [vmem:[#allocation7 + $0x4c] sm:$0xf]
    %v958 = vld [vmem:[#allocation7 + $0x50] sm:$0xf]
    %v959 = vld [vmem:[#allocation7 + $0x54] sm:$0xf]
    %v960 = vld [vmem:[#allocation7 + $0x58] sm:$0xf]
    %v961 = vld [vmem:[#allocation7 + $0x5c] sm:$0xf]
    %v962 = vld [vmem:[#allocation7 + $0x60] sm:$0xf]
    %v963 = vld [vmem:[#allocation7 + $0x64] sm:$0xf]
    %v964 = vld [vmem:[#allocation7 + $0x68] sm:$0xf]
    %v965 = vld [vmem:[#allocation7 + $0x6c] sm:$0xf]
    %v966 = vld [vmem:[#allocation7 + $0x70] sm:$0xf]
    %v967 = vld [vmem:[#allocation7 + $0x74] sm:$0xf]
    %v968 = vld [vmem:[#allocation7 + $0x78] sm:$0xf]
    %v969 = vld [vmem:[#allocation7 + $0x7c] sm:$0xf]
    %v970 = vld [vmem:[#allocation7 + $0x80] sm:$0xf]
    %v971 = vld [vmem:[#allocation7 + $0x84] sm:$0xf]
    %v972 = vld [vmem:[#allocation7 + $0x88] sm:$0xf]
    %v973 = vld [vmem:[#allocation7 + $0x8c] sm:$0xf]
    %v974 = vld [vmem:[#allocation7 + $0x90] sm:$0xf]
    %v975 = vld [vmem:[#allocation7 + $0x94] sm:$0xf]
    %v976 = vld [vmem:[#allocation7 + $0x98] sm:$0xf]
    %v977 = vld [vmem:[#allocation7 + $0x9c] sm:$0xf]
    %v978 = vld [vmem:[#allocation7 + $0xa0] sm:$0xf]
    %v979 = vld [vmem:[#allocation7 + $0xa4] sm:$0xf]
    %v980 = vld [vmem:[#allocation7 + $0xa8] sm:$0xf]
    %v981 = vld [vmem:[#allocation7 + $0xac] sm:$0xf]
    %v982 = vld [vmem:[#allocation7 + $0xb0] sm:$0xf]
    %v983 = vld [vmem:[#allocation7 + $0xb4] sm:$0xf]
    %v984 = vld [vmem:[#allocation7 + $0xb8] sm:$0xf]
    %v985 = vld [vmem:[#allocation7 + $0xbc] sm:$0xf]
    %v986 = vld [vmem:[#allocation7 + $0xc0] sm:$0xf]
    %v987 = vld [vmem:[#allocation7 + $0xc4] sm:$0xf]
    %v988 = vld [vmem:[#allocation7 + $0xc8] sm:$0xf]
    %v989 = vld [vmem:[#allocation7 + $0xcc] sm:$0xf]
    %v990 = vld [vmem:[#allocation7 + $0xd0] sm:$0xf]
    %v991 = vld [vmem:[#allocation7 + $0xd4] sm:$0xf]
    %v992 = vld [vmem:[#allocation7 + $0xd8] sm:$0xf]
    %v993 = vld [vmem:[#allocation7 + $0xdc] sm:$0xf]
    %v994 = vld [vmem:[#allocation7 + $0xe0] sm:$0xf]
    %v995 = vld [vmem:[#allocation7 + $0xe4] sm:$0xf]
    %v996 = vld [vmem:[#allocation7 + $0xe8] sm:$0xf]
    %v997 = vld [vmem:[#allocation7 + $0xec] sm:$0xf]
    %v998 = vld [vmem:[#allocation7 + $0xf0] sm:$0xf]
    %v999 = vld [vmem:[#allocation7 + $0xf4] sm:$0xf]
    %v1000 = vld [vmem:[#allocation7 + $0xf8] sm:$0xf]
    %v1001 = vld [vmem:[#allocation7 + $0xfc] sm:$0xf]
    %v1002 = vld [vmem:[#allocation7 + $0x100] sm:$0xf]
    %v1003 = vld [vmem:[#allocation7 + $0x104] sm:$0xf]
    %v1004 = vld [vmem:[#allocation7 + $0x108] sm:$0xf]
    %v1005 = vld [vmem:[#allocation7 + $0x10c] sm:$0xf]
    %v1006 = vld [vmem:[#allocation7 + $0x110] sm:$0xf]
    %v1007 = vld [vmem:[#allocation7 + $0x114] sm:$0xf]
    %v1008 = vld [vmem:[#allocation7 + $0x118] sm:$0xf]
    %v1009 = vld [vmem:[#allocation7 + $0x11c] sm:$0xf]
    %v1010 = vld [vmem:[#allocation7 + $0x120] sm:$0xf]
    %v1011 = vld [vmem:[#allocation7 + $0x124] sm:$0xf]
    %v1012 = vld [vmem:[#allocation7 + $0x128] sm:$0xf]
    %v1013 = vld [vmem:[#allocation7 + $0x12c] sm:$0xf]
    %v1014 = vld [vmem:[#allocation7 + $0x130] sm:$0xf]
    %v1015 = vld [vmem:[#allocation7 + $0x134] sm:$0xf]
    %v1016 = vld [vmem:[#allocation7 + $0x138] sm:$0xf]
    %v1017 = vld [vmem:[#allocation7 + $0x13c] sm:$0xf]
    %v1018 = vld [vmem:[#allocation7 + $0x140] sm:$0xf]
    %v1019 = vld [vmem:[#allocation7 + $0x144] sm:$0xf]
    %v1020 = vld [vmem:[#allocation7 + $0x148] sm:$0xf]
    %v1021 = vld [vmem:[#allocation7 + $0x14c] sm:$0xf]
    %v1022 = vld [vmem:[#allocation7 + $0x150] sm:$0xf]
    %v1023 = vld [vmem:[#allocation7 + $0x154] sm:$0xf]
    %v1024 = vld [vmem:[#allocation7 + $0x158] sm:$0xf]
    %v1025 = vld [vmem:[#allocation7 + $0x15c] sm:$0xf]
    %v1026 = vld [vmem:[#allocation7 + $0x160] sm:$0xf]
    %v1027 = vld [vmem:[#allocation7 + $0x164] sm:$0xf]
    %v1028 = vld [vmem:[#allocation7 + $0x168] sm:$0xf]
    %v1029 = vld [vmem:[#allocation7 + $0x16c] sm:$0xf]
    %v1030 = vld [vmem:[#allocation7 + $0x170] sm:$0xf]
    %v1031 = vld [vmem:[#allocation7 + $0x174] sm:$0xf]
    %v1032 = vld [vmem:[#allocation7 + $0x178] sm:$0xf]
    %v1033 = vld [vmem:[#allocation7 + $0x17c] sm:$0xf]
    %v1034 = vld [vmem:[#allocation7 + $0x180] sm:$0xf]
    %v1035 = vld [vmem:[#allocation7 + $0x184] sm:$0xf]
    %v1036 = vld [vmem:[#allocation7 + $0x188] sm:$0xf]
    %v1037 = vld [vmem:[#allocation7 + $0x18c] sm:$0xf]
    %v1038 = vld [vmem:[#allocation7 + $0x190] sm:$0xf]
    %v1039 = vld [vmem:[#allocation7 + $0x194] sm:$0xf]
    %v1040 = vld [vmem:[#allocation7 + $0x198] sm:$0xf]
    %v1041 = vld [vmem:[#allocation7 + $0x19c] sm:$0xf]
    %v1042 = vld [vmem:[#allocation7 + $0x1a0] sm:$0xf]
    %v1043 = vld [vmem:[#allocation7 + $0x1a4] sm:$0xf]
    %v1044 = vld [vmem:[#allocation7 + $0x1a8] sm:$0xf]
    %v1045 = vld [vmem:[#allocation7 + $0x1ac] sm:$0xf]
    %v1046 = vld [vmem:[#allocation7 + $0x1b0] sm:$0xf]
    %v1047 = vld [vmem:[#allocation7 + $0x1b4] sm:$0xf]
    %v1048 = vld [vmem:[#allocation7 + $0x1b8] sm:$0xf]
    %v1049 = vld [vmem:[#allocation7 + $0x1bc] sm:$0xf]
    %v1050 = vld [vmem:[#allocation7 + $0x1c0] sm:$0xf]
    %v1051 = vld [vmem:[#allocation7 + $0x1c4] sm:$0xf]
    %v1052 = vld [vmem:[#allocation7 + $0x1c8] sm:$0xf]
    %v1053 = vld [vmem:[#allocation7 + $0x1cc] sm:$0xf]
    %v1054 = vld [vmem:[#allocation7 + $0x1d0] sm:$0xf]
    %v1055 = vld [vmem:[#allocation7 + $0x1d4] sm:$0xf]
    %v1056 = vld [vmem:[#allocation7 + $0x1d8] sm:$0xf]
    %v1057 = vld [vmem:[#allocation7 + $0x1dc] sm:$0xf]
    %v1058 = vld [vmem:[#allocation7 + $0x1e0] sm:$0xf]
    %v1059 = vld [vmem:[#allocation7 + $0x1e4] sm:$0xf]
    %v1060 = vld [vmem:[#allocation7 + $0x1e8] sm:$0xf]
    %v1061 = vld [vmem:[#allocation7 + $0x1ec] sm:$0xf]
    %v1062 = vld [vmem:[#allocation7 + $0x1f0] sm:$0xf]
    %v1063 = vld [vmem:[#allocation7 + $0x1f4] sm:$0xf]
    %v1064 = vld [vmem:[#allocation7 + $0x1f8] sm:$0xf]
    %v1065 = vld [vmem:[#allocation7 + $0x1fc] sm:$0xf]
    %v1066 = vld [vmem:[#allocation7 + $0x200] sm:$0xf]
    %v1067 = vld [vmem:[#allocation7 + $0x204] sm:$0xf]
    %v1068 = vld [vmem:[#allocation7 + $0x208] sm:$0xf]
    %v1069 = vld [vmem:[#allocation7 + $0x20c] sm:$0xf]
    %v1070 = vld [vmem:[#allocation7 + $0x210] sm:$0xf]
    %v1071 = vld [vmem:[#allocation7 + $0x214] sm:$0xf]
    %v1072 = vld [vmem:[#allocation7 + $0x218] sm:$0xf]
    %v1073 = vld [vmem:[#allocation7 + $0x21c] sm:$0xf]
    %v1074 = vld [vmem:[#allocation7 + $0x220] sm:$0xf]
    %v1075 = vld [vmem:[#allocation7 + $0x224] sm:$0xf]
    %v1076 = vld [vmem:[#allocation7 + $0x228] sm:$0xf]
    %v1077 = vld [vmem:[#allocation7 + $0x22c] sm:$0xf]
    %v1078 = vld [vmem:[#allocation7 + $0x230] sm:$0xf]
    %v1079 = vld [vmem:[#allocation7 + $0x234] sm:$0xf]
    %v1080 = vld [vmem:[#allocation7 + $0x238] sm:$0xf]
    %v1081 = vld [vmem:[#allocation7 + $0x23c] sm:$0xf]
    %v1082 = vld [vmem:[#allocation7 + $0x240] sm:$0xf]
    %v1083 = vld [vmem:[#allocation7 + $0x244] sm:$0xf]
    %v1084 = vld [vmem:[#allocation7 + $0x248] sm:$0xf]
    %v1085 = vld [vmem:[#allocation7 + $0x24c] sm:$0xf]
    %v1086 = vld [vmem:[#allocation7 + $0x250] sm:$0xf]
    %v1087 = vld [vmem:[#allocation7 + $0x254] sm:$0xf]
    %v1088 = vld [vmem:[#allocation7 + $0x258] sm:$0xf]
    %v1089 = vld [vmem:[#allocation7 + $0x25c] sm:$0xf]
    %v1090 = vld [vmem:[#allocation7 + $0x260] sm:$0xf]
    %v1091 = vld [vmem:[#allocation7 + $0x264] sm:$0xf]
    %v1092 = vld [vmem:[#allocation7 + $0x268] sm:$0xf]
    %v1093 = vld [vmem:[#allocation7 + $0x26c] sm:$0xf]
    %v1094 = vld [vmem:[#allocation7 + $0x270] sm:$0xf]
    %v1095 = vld [vmem:[#allocation7 + $0x274] sm:$0xf]
    %v1096 = vld [vmem:[#allocation7 + $0x278] sm:$0xf]
    %v1097 = vld [vmem:[#allocation7 + $0x27c] sm:$0xf]
    %v1098 = vld [vmem:[#allocation7 + $0x280] sm:$0xf]
    %v1099 = vld [vmem:[#allocation7 + $0x284] sm:$0xf]
    %v1100 = vld [vmem:[#allocation7 + $0x288] sm:$0xf]
    %v1101 = vld [vmem:[#allocation7 + $0x28c] sm:$0xf]
    %v1102 = vld [vmem:[#allocation7 + $0x290] sm:$0xf]
    %v1103 = vld [vmem:[#allocation7 + $0x294] sm:$0xf]
    %v1104 = vld [vmem:[#allocation7 + $0x298] sm:$0xf]
    %v1105 = vld [vmem:[#allocation7 + $0x29c] sm:$0xf]
    %v1106 = vld [vmem:[#allocation7 + $0x2a0] sm:$0xf]
    %v1107 = vld [vmem:[#allocation7 + $0x2a4] sm:$0xf]
    %v1108 = vld [vmem:[#allocation7 + $0x2a8] sm:$0xf]
    %v1109 = vld [vmem:[#allocation7 + $0x2ac] sm:$0xf]
    %v1110 = vld [vmem:[#allocation7 + $0x2b0] sm:$0xf]
    %v1111 = vld [vmem:[#allocation7 + $0x2b4] sm:$0xf]
    %v1112 = vld [vmem:[#allocation7 + $0x2b8] sm:$0xf]
    %v1113 = vld [vmem:[#allocation7 + $0x2bc] sm:$0xf]
    %v1114 = vld [vmem:[#allocation7 + $0x2c0] sm:$0xf]
    %v1115 = vld [vmem:[#allocation7 + $0x2c4] sm:$0xf]
    %v1116 = vld [vmem:[#allocation7 + $0x2c8] sm:$0xf]
    %v1117 = vld [vmem:[#allocation7 + $0x2cc] sm:$0xf]
    %v1118 = vld [vmem:[#allocation7 + $0x2d0] sm:$0xf]
    %v1119 = vld [vmem:[#allocation7 + $0x2d4] sm:$0xf]
    %v1120 = vld [vmem:[#allocation7 + $0x2d8] sm:$0xf]
    %v1121 = vld [vmem:[#allocation7 + $0x2dc] sm:$0xf]
    %v1122 = vld [vmem:[#allocation7 + $0x2e0] sm:$0xf]
    %v1123 = vld [vmem:[#allocation7 + $0x2e4] sm:$0xf]
    %v1124 = vld [vmem:[#allocation7 + $0x2e8] sm:$0xf]
    %v1125 = vld [vmem:[#allocation7 + $0x2ec] sm:$0xf]
    %v1126 = vld [vmem:[#allocation7 + $0x2f0] sm:$0xf]
    %v1127 = vld [vmem:[#allocation7 + $0x2f4] sm:$0xf]
    %v1128 = vld [vmem:[#allocation7 + $0x2f8] sm:$0xf]
    %v1129 = vld [vmem:[#allocation7 + $0x2fc] sm:$0xf]
    %v1130 = vld [vmem:[#allocation7 + $0x300] sm:$0xf]
    %v1131 = vld [vmem:[#allocation7 + $0x304] sm:$0xf]
    %v1132 = vld [vmem:[#allocation7 + $0x308] sm:$0xf]
    %v1133 = vld [vmem:[#allocation7 + $0x30c] sm:$0xf]
    %v1134 = vld [vmem:[#allocation7 + $0x310] sm:$0xf]
    %v1135 = vld [vmem:[#allocation7 + $0x314] sm:$0xf]
    %v1136 = vld [vmem:[#allocation7 + $0x318] sm:$0xf]
    %v1137 = vld [vmem:[#allocation7 + $0x31c] sm:$0xf]
    %v1138 = vld [vmem:[#allocation7 + $0x320] sm:$0xf]
    %v1139 = vld [vmem:[#allocation7 + $0x324] sm:$0xf]
    %v1140 = vld [vmem:[#allocation7 + $0x328] sm:$0xf]
    %v1141 = vld [vmem:[#allocation7 + $0x32c] sm:$0xf]
    %v1142 = vld [vmem:[#allocation7 + $0x330] sm:$0xf]
    %v1143 = vld [vmem:[#allocation7 + $0x334] sm:$0xf]
    %v1144 = vld [vmem:[#allocation7 + $0x338] sm:$0xf]
    %v1145 = vld [vmem:[#allocation7 + $0x33c] sm:$0xf]
    %v1146 = vld [vmem:[#allocation7 + $0x340] sm:$0xf]
    %v1147 = vld [vmem:[#allocation7 + $0x344] sm:$0xf]
    %v1148 = vld [vmem:[#allocation7 + $0x348] sm:$0xf]
    %v1149 = vld [vmem:[#allocation7 + $0x34c] sm:$0xf]
    %v1150 = vld [vmem:[#allocation7 + $0x350] sm:$0xf]
    %v1151 = vld [vmem:[#allocation7 + $0x354] sm:$0xf]
    %v1152 = vld [vmem:[#allocation7 + $0x358] sm:$0xf]
    %v1153 = vld [vmem:[#allocation7 + $0x35c] sm:$0xf]
    %v1154 = vld [vmem:[#allocation7 + $0x360] sm:$0xf]
    %v1155 = vld [vmem:[#allocation7 + $0x364] sm:$0xf]
    %v1156 = vld [vmem:[#allocation7 + $0x368] sm:$0xf]
    %v1157 = vld [vmem:[#allocation7 + $0x36c] sm:$0xf]
    %v1158 = vld [vmem:[#allocation7 + $0x370] sm:$0xf]
    %v1159 = vld [vmem:[#allocation7 + $0x374] sm:$0xf]
    %v1160 = vld [vmem:[#allocation7 + $0x378] sm:$0xf]
    %v1161 = vld [vmem:[#allocation7 + $0x37c] sm:$0xf]
    %v1162 = vld [vmem:[#allocation7 + $0x380] sm:$0xf]
    %v1163 = vld [vmem:[#allocation7 + $0x384] sm:$0xf]
    %v1164 = vld [vmem:[#allocation7 + $0x388] sm:$0xf]
    %v1165 = vld [vmem:[#allocation7 + $0x38c] sm:$0xf]
    %v1166 = vld [vmem:[#allocation7 + $0x390] sm:$0xf]
    %v1167 = vld [vmem:[#allocation7 + $0x394] sm:$0xf]
    %v1168 = vld [vmem:[#allocation7 + $0x398] sm:$0xf]
    %v1169 = vld [vmem:[#allocation7 + $0x39c] sm:$0xf]
    %v1170 = vld [vmem:[#allocation7 + $0x3a0] sm:$0xf]
    %v1171 = vld [vmem:[#allocation7 + $0x3a4] sm:$0xf]
    %v1172 = vld [vmem:[#allocation7 + $0x3a8] sm:$0xf]
    %v1173 = vld [vmem:[#allocation7 + $0x3ac] sm:$0xf]
    %v1174 = vld [vmem:[#allocation7 + $0x3b0] sm:$0xf]
    %v1175 = vld [vmem:[#allocation7 + $0x3b4] sm:$0xf]
    %v1176 = vld [vmem:[#allocation7 + $0x3b8] sm:$0xf]
    %v1177 = vld [vmem:[#allocation7 + $0x3bc] sm:$0xf]
    %v1178 = vld [vmem:[#allocation7 + $0x3c0] sm:$0xf]
    %v1179 = vld [vmem:[#allocation7 + $0x3c4] sm:$0xf]
    %v1180 = vld [vmem:[#allocation7 + $0x3c8] sm:$0xf]
    %v1181 = vld [vmem:[#allocation7 + $0x3cc] sm:$0xf]
    %v1182 = vld [vmem:[#allocation7 + $0x3d0] sm:$0xf]
    %v1183 = vld [vmem:[#allocation7 + $0x3d4] sm:$0xf]
    %v1184 = vld [vmem:[#allocation7 + $0x3d8] sm:$0xf]
    %v1185 = vld [vmem:[#allocation7 + $0x3dc] sm:$0xf]
    %v1186 = vld [vmem:[#allocation7 + $0x3e0] sm:$0xf]
    %v1187 = vld [vmem:[#allocation7 + $0x3e4] sm:$0xf]
    %v1188 = vld [vmem:[#allocation7 + $0x3e8] sm:$0xf]
    %v1189 = vld [vmem:[#allocation7 + $0x3ec] sm:$0xf]
    %v1190 = vld [vmem:[#allocation7 + $0x3f0] sm:$0xf]
    %v1191 = vld [vmem:[#allocation7 + $0x3f4] sm:$0xf]
    %v1192 = vld [vmem:[#allocation7 + $0x3f8] sm:$0xf]
    %v1193 = vld [vmem:[#allocation7 + $0x3fc] sm:$0xf]
    %v1195 = vlaneseq
    %v1196 = vshrl.u32 %v1195, 7
    %v1197 = vsub.s32 0, %v1196
    %v1198 = vrot.slane %v88, %v1197
    %v1456 = vunpack.c.l.b16 %v938
    %v1457 = vunpack.c.l.b16 %v939
    %v1458 = vunpack.c.l.b16 %v940
    %v1459 = vunpack.c.l.b16 %v941
    %v1460 = vunpack.c.l.b16 %v942
    %v1461 = vunpack.c.l.b16 %v943
    %v1462 = vunpack.c.l.b16 %v944
    %v1463 = vunpack.c.l.b16 %v945
    %v1464 = vunpack.c.l.b16 %v946
    %v1465 = vunpack.c.l.b16 %v947
    %v1466 = vunpack.c.l.b16 %v948
    %v1467 = vunpack.c.l.b16 %v949
    %v1468 = vunpack.c.l.b16 %v950
    %v1469 = vunpack.c.l.b16 %v951
    %v1470 = vunpack.c.l.b16 %v952
    %v1471 = vunpack.c.l.b16 %v953
    %v1472 = vunpack.c.l.b16 %v954
    %v1473 = vunpack.c.l.b16 %v955
    %v1474 = vunpack.c.l.b16 %v956
    %v1475 = vunpack.c.l.b16 %v957
    %v1476 = vunpack.c.l.b16 %v958
    %v1477 = vunpack.c.l.b16 %v959
    %v1478 = vunpack.c.l.b16 %v960
    %v1479 = vunpack.c.l.b16 %v961
    %v1480 = vunpack.c.l.b16 %v962
    %v1481 = vunpack.c.l.b16 %v963
    %v1482 = vunpack.c.l.b16 %v964
    %v1483 = vunpack.c.l.b16 %v965
    %v1484 = vunpack.c.l.b16 %v966
    %v1485 = vunpack.c.l.b16 %v967
    %v1486 = vunpack.c.l.b16 %v968
    %v1487 = vunpack.c.l.b16 %v969
    %v1488 = vunpack.c.l.b16 %v970
    %v1489 = vunpack.c.l.b16 %v971
    %v1490 = vunpack.c.l.b16 %v972
    %v1491 = vunpack.c.l.b16 %v973
    %v1492 = vunpack.c.l.b16 %v974
    %v1493 = vunpack.c.l.b16 %v975
    %v1494 = vunpack.c.l.b16 %v976
    %v1495 = vunpack.c.l.b16 %v977
    %v1496 = vunpack.c.l.b16 %v978
    %v1497 = vunpack.c.l.b16 %v979
    %v1498 = vunpack.c.l.b16 %v980
    %v1499 = vunpack.c.l.b16 %v981
    %v1500 = vunpack.c.l.b16 %v982
    %v1501 = vunpack.c.l.b16 %v983
    %v1502 = vunpack.c.l.b16 %v984
    %v1503 = vunpack.c.l.b16 %v985
    %v1504 = vunpack.c.l.b16 %v986
    %v1505 = vunpack.c.l.b16 %v987
    %v1506 = vunpack.c.l.b16 %v988
    %v1507 = vunpack.c.l.b16 %v989
    %v1508 = vunpack.c.l.b16 %v990
    %v1509 = vunpack.c.l.b16 %v991
    %v1510 = vunpack.c.l.b16 %v992
    %v1511 = vunpack.c.l.b16 %v993
    %v1512 = vunpack.c.l.b16 %v994
    %v1513 = vunpack.c.l.b16 %v995
    %v1514 = vunpack.c.l.b16 %v996
    %v1515 = vunpack.c.l.b16 %v997
    %v1516 = vunpack.c.l.b16 %v998
    %v1517 = vunpack.c.l.b16 %v999
    %v1518 = vunpack.c.l.b16 %v1000
    %v1519 = vunpack.c.l.b16 %v1001
    %v1520 = vunpack.c.l.b16 %v1002
    %v1521 = vunpack.c.l.b16 %v1003
    %v1522 = vunpack.c.l.b16 %v1004
    %v1523 = vunpack.c.l.b16 %v1005
    %v1524 = vunpack.c.l.b16 %v1006
    %v1525 = vunpack.c.l.b16 %v1007
    %v1526 = vunpack.c.l.b16 %v1008
    %v1527 = vunpack.c.l.b16 %v1009
    %v1528 = vunpack.c.l.b16 %v1010
    %v1529 = vunpack.c.l.b16 %v1011
    %v1530 = vunpack.c.l.b16 %v1012
    %v1531 = vunpack.c.l.b16 %v1013
    %v1532 = vunpack.c.l.b16 %v1014
    %v1533 = vunpack.c.l.b16 %v1015
    %v1534 = vunpack.c.l.b16 %v1016
    %v1535 = vunpack.c.l.b16 %v1017
    %v1536 = vunpack.c.l.b16 %v1018
    %v1537 = vunpack.c.l.b16 %v1019
    %v1538 = vunpack.c.l.b16 %v1020
    %v1539 = vunpack.c.l.b16 %v1021
    %v1540 = vunpack.c.l.b16 %v1022
    %v1541 = vunpack.c.l.b16 %v1023
    %v1542 = vunpack.c.l.b16 %v1024
    %v1543 = vunpack.c.l.b16 %v1025
    %v1544 = vunpack.c.l.b16 %v1026
    %v1545 = vunpack.c.l.b16 %v1027
    %v1546 = vunpack.c.l.b16 %v1028
    %v1547 = vunpack.c.l.b16 %v1029
    %v1548 = vunpack.c.l.b16 %v1030
    %v1549 = vunpack.c.l.b16 %v1031
    %v1550 = vunpack.c.l.b16 %v1032
    %v1551 = vunpack.c.l.b16 %v1033
    %v1552 = vunpack.c.l.b16 %v1034
    %v1553 = vunpack.c.l.b16 %v1035
    %v1554 = vunpack.c.l.b16 %v1036
    %v1555 = vunpack.c.l.b16 %v1037
    %v1556 = vunpack.c.l.b16 %v1038
    %v1557 = vunpack.c.l.b16 %v1039
    %v1558 = vunpack.c.l.b16 %v1040
    %v1559 = vunpack.c.l.b16 %v1041
    %v1560 = vunpack.c.l.b16 %v1042
    %v1561 = vunpack.c.l.b16 %v1043
    %v1562 = vunpack.c.l.b16 %v1044
    %v1563 = vunpack.c.l.b16 %v1045
    %v1564 = vunpack.c.l.b16 %v1046
    %v1565 = vunpack.c.l.b16 %v1047
    %v1566 = vunpack.c.l.b16 %v1048
    %v1567 = vunpack.c.l.b16 %v1049
    %v1568 = vunpack.c.l.b16 %v1050
    %v1569 = vunpack.c.l.b16 %v1051
    %v1570 = vunpack.c.l.b16 %v1052
    %v1571 = vunpack.c.l.b16 %v1053
    %v1572 = vunpack.c.l.b16 %v1054
    %v1573 = vunpack.c.l.b16 %v1055
    %v1574 = vunpack.c.l.b16 %v1056
    %v1575 = vunpack.c.l.b16 %v1057
    %v1576 = vunpack.c.l.b16 %v1058
    %v1577 = vunpack.c.l.b16 %v1059
    %v1578 = vunpack.c.l.b16 %v1060
    %v1579 = vunpack.c.l.b16 %v1061
    %v1580 = vunpack.c.l.b16 %v1062
    %v1581 = vunpack.c.l.b16 %v1063
    %v1582 = vunpack.c.l.b16 %v1064
    %v1583 = vunpack.c.l.b16 %v1065
    %v1584 = vunpack.c.l.b16 %v1066
    %v1585 = vunpack.c.l.b16 %v1067
    %v1586 = vunpack.c.l.b16 %v1068
    %v1587 = vunpack.c.l.b16 %v1069
    %v1588 = vunpack.c.l.b16 %v1070
    %v1589 = vunpack.c.l.b16 %v1071
    %v1590 = vunpack.c.l.b16 %v1072
    %v1591 = vunpack.c.l.b16 %v1073
    %v1592 = vunpack.c.l.b16 %v1074
    %v1593 = vunpack.c.l.b16 %v1075
    %v1594 = vunpack.c.l.b16 %v1076
    %v1595 = vunpack.c.l.b16 %v1077
    %v1596 = vunpack.c.l.b16 %v1078
    %v1597 = vunpack.c.l.b16 %v1079
    %v1598 = vunpack.c.l.b16 %v1080
    %v1599 = vunpack.c.l.b16 %v1081
    %v1600 = vunpack.c.l.b16 %v1082
    %v1601 = vunpack.c.l.b16 %v1083
    %v1602 = vunpack.c.l.b16 %v1084
    %v1603 = vunpack.c.l.b16 %v1085
    %v1604 = vunpack.c.l.b16 %v1086
    %v1605 = vunpack.c.l.b16 %v1087
    %v1606 = vunpack.c.l.b16 %v1088
    %v1607 = vunpack.c.l.b16 %v1089
    %v1608 = vunpack.c.l.b16 %v1090
    %v1609 = vunpack.c.l.b16 %v1091
    %v1610 = vunpack.c.l.b16 %v1092
    %v1611 = vunpack.c.l.b16 %v1093
    %v1612 = vunpack.c.l.b16 %v1094
    %v1613 = vunpack.c.l.b16 %v1095
    %v1614 = vunpack.c.l.b16 %v1096
    %v1615 = vunpack.c.l.b16 %v1097
    %v1616 = vunpack.c.l.b16 %v1098
    %v1617 = vunpack.c.l.b16 %v1099
    %v1618 = vunpack.c.l.b16 %v1100
    %v1619 = vunpack.c.l.b16 %v1101
    %v1620 = vunpack.c.l.b16 %v1102
    %v1621 = vunpack.c.l.b16 %v1103
    %v1622 = vunpack.c.l.b16 %v1104
    %v1623 = vunpack.c.l.b16 %v1105
    %v1624 = vunpack.c.l.b16 %v1106
    %v1625 = vunpack.c.l.b16 %v1107
    %v1626 = vunpack.c.l.b16 %v1108
    %v1627 = vunpack.c.l.b16 %v1109
    %v1628 = vunpack.c.l.b16 %v1110
    %v1629 = vunpack.c.l.b16 %v1111
    %v1630 = vunpack.c.l.b16 %v1112
    %v1631 = vunpack.c.l.b16 %v1113
    %v1632 = vunpack.c.l.b16 %v1114
    %v1633 = vunpack.c.l.b16 %v1115
    %v1634 = vunpack.c.l.b16 %v1116
    %v1635 = vunpack.c.l.b16 %v1117
    %v1636 = vunpack.c.l.b16 %v1118
    %v1637 = vunpack.c.l.b16 %v1119
    %v1638 = vunpack.c.l.b16 %v1120
    %v1639 = vunpack.c.l.b16 %v1121
    %v1640 = vunpack.c.l.b16 %v1122
    %v1641 = vunpack.c.l.b16 %v1123
    %v1642 = vunpack.c.l.b16 %v1124
    %v1643 = vunpack.c.l.b16 %v1125
    %v1644 = vunpack.c.l.b16 %v1126
    %v1645 = vunpack.c.l.b16 %v1127
    %v1646 = vunpack.c.l.b16 %v1128
    %v1647 = vunpack.c.l.b16 %v1129
    %v1648 = vunpack.c.l.b16 %v1130
    %v1649 = vunpack.c.l.b16 %v1131
    %v1650 = vunpack.c.l.b16 %v1132
    %v1651 = vunpack.c.l.b16 %v1133
    %v1652 = vunpack.c.l.b16 %v1134
    %v1653 = vunpack.c.l.b16 %v1135
    %v1654 = vunpack.c.l.b16 %v1136
    %v1655 = vunpack.c.l.b16 %v1137
    %v1656 = vunpack.c.l.b16 %v1138
    %v1657 = vunpack.c.l.b16 %v1139
    %v1658 = vunpack.c.l.b16 %v1140
    %v1659 = vunpack.c.l.b16 %v1141
    %v1660 = vunpack.c.l.b16 %v1142
    %v1661 = vunpack.c.l.b16 %v1143
    %v1662 = vunpack.c.l.b16 %v1144
    %v1663 = vunpack.c.l.b16 %v1145
    %v1664 = vunpack.c.l.b16 %v1146
    %v1665 = vunpack.c.l.b16 %v1147
    %v1666 = vunpack.c.l.b16 %v1148
    %v1667 = vunpack.c.l.b16 %v1149
    %v1668 = vunpack.c.l.b16 %v1150
    %v1669 = vunpack.c.l.b16 %v1151
    %v1670 = vunpack.c.l.b16 %v1152
    %v1671 = vunpack.c.l.b16 %v1153
    %v1672 = vunpack.c.l.b16 %v1154
    %v1673 = vunpack.c.l.b16 %v1155
    %v1674 = vunpack.c.l.b16 %v1156
    %v1675 = vunpack.c.l.b16 %v1157
    %v1676 = vunpack.c.l.b16 %v1158
    %v1677 = vunpack.c.l.b16 %v1159
    %v1678 = vunpack.c.l.b16 %v1160
    %v1679 = vunpack.c.l.b16 %v1161
    %v1680 = vunpack.c.l.b16 %v1162
    %v1681 = vunpack.c.l.b16 %v1163
    %v1682 = vunpack.c.l.b16 %v1164
    %v1683 = vunpack.c.l.b16 %v1165
    %v1684 = vunpack.c.l.b16 %v1166
    %v1685 = vunpack.c.l.b16 %v1167
    %v1686 = vunpack.c.l.b16 %v1168
    %v1687 = vunpack.c.l.b16 %v1169
    %v1688 = vunpack.c.l.b16 %v1170
    %v1689 = vunpack.c.l.b16 %v1171
    %v1690 = vunpack.c.l.b16 %v1172
    %v1691 = vunpack.c.l.b16 %v1173
    %v1692 = vunpack.c.l.b16 %v1174
    %v1693 = vunpack.c.l.b16 %v1175
    %v1694 = vunpack.c.l.b16 %v1176
    %v1695 = vunpack.c.l.b16 %v1177
    %v1696 = vunpack.c.l.b16 %v1178
    %v1697 = vunpack.c.l.b16 %v1179
    %v1698 = vunpack.c.l.b16 %v1180
    %v1699 = vunpack.c.l.b16 %v1181
    %v1700 = vunpack.c.l.b16 %v1182
    %v1701 = vunpack.c.l.b16 %v1183
    %v1702 = vunpack.c.l.b16 %v1184
    %v1703 = vunpack.c.l.b16 %v1185
    %v1704 = vunpack.c.l.b16 %v1186
    %v1705 = vunpack.c.l.b16 %v1187
    %v1706 = vunpack.c.l.b16 %v1188
    %v1707 = vunpack.c.l.b16 %v1189
    %v1708 = vunpack.c.l.b16 %v1190
    %v1709 = vunpack.c.l.b16 %v1191
    %v1710 = vunpack.c.l.b16 %v1192
    %v1711 = vunpack.c.l.b16 %v1193
    %v1712 = vpack.c.b16 %v1457, %v1456
    %v1713 = vpack.c.b16 %v1459, %v1458
    %v1714 = vpack.c.b16 %v1461, %v1460
    %v1715 = vpack.c.b16 %v1463, %v1462
    %v1716 = vpack.c.b16 %v1465, %v1464
    %v1717 = vpack.c.b16 %v1467, %v1466
    %v1718 = vpack.c.b16 %v1469, %v1468
    %v1719 = vpack.c.b16 %v1471, %v1470
    %v1720 = vpack.c.b16 %v1473, %v1472
    %v1721 = vpack.c.b16 %v1475, %v1474
    %v1722 = vpack.c.b16 %v1477, %v1476
    %v1723 = vpack.c.b16 %v1479, %v1478
    %v1724 = vpack.c.b16 %v1481, %v1480
    %v1725 = vpack.c.b16 %v1483, %v1482
    %v1726 = vpack.c.b16 %v1485, %v1484
    %v1727 = vpack.c.b16 %v1487, %v1486
    %v1728 = vpack.c.b16 %v1489, %v1488
    %v1729 = vpack.c.b16 %v1491, %v1490
    %v1730 = vpack.c.b16 %v1493, %v1492
    %v1731 = vpack.c.b16 %v1495, %v1494
    %v1732 = vpack.c.b16 %v1497, %v1496
    %v1733 = vpack.c.b16 %v1499, %v1498
    %v1734 = vpack.c.b16 %v1501, %v1500
    %v1735 = vpack.c.b16 %v1503, %v1502
    %v1736 = vpack.c.b16 %v1505, %v1504
    %v1737 = vpack.c.b16 %v1507, %v1506
    %v1738 = vpack.c.b16 %v1509, %v1508
    %v1739 = vpack.c.b16 %v1511, %v1510
    %v1740 = vpack.c.b16 %v1513, %v1512
    %v1741 = vpack.c.b16 %v1515, %v1514
    %v1742 = vpack.c.b16 %v1517, %v1516
    %v1743 = vpack.c.b16 %v1519, %v1518
    %v1744 = vpack.c.b16 %v1521, %v1520
    %v1745 = vpack.c.b16 %v1523, %v1522
    %v1746 = vpack.c.b16 %v1525, %v1524
    %v1747 = vpack.c.b16 %v1527, %v1526
    %v1748 = vpack.c.b16 %v1529, %v1528
    %v1749 = vpack.c.b16 %v1531, %v1530
    %v1750 = vpack.c.b16 %v1533, %v1532
    %v1751 = vpack.c.b16 %v1535, %v1534
    %v1752 = vpack.c.b16 %v1537, %v1536
    %v1753 = vpack.c.b16 %v1539, %v1538
    %v1754 = vpack.c.b16 %v1541, %v1540
    %v1755 = vpack.c.b16 %v1543, %v1542
    %v1756 = vpack.c.b16 %v1545, %v1544
    %v1757 = vpack.c.b16 %v1547, %v1546
    %v1758 = vpack.c.b16 %v1549, %v1548
    %v1759 = vpack.c.b16 %v1551, %v1550
    %v1760 = vpack.c.b16 %v1553, %v1552
    %v1761 = vpack.c.b16 %v1555, %v1554
    %v1762 = vpack.c.b16 %v1557, %v1556
    %v1763 = vpack.c.b16 %v1559, %v1558
    %v1764 = vpack.c.b16 %v1561, %v1560
    %v1765 = vpack.c.b16 %v1563, %v1562
    %v1766 = vpack.c.b16 %v1565, %v1564
    %v1767 = vpack.c.b16 %v1567, %v1566
    %v1768 = vpack.c.b16 %v1569, %v1568
    %v1769 = vpack.c.b16 %v1571, %v1570
    %v1770 = vpack.c.b16 %v1573, %v1572
    %v1771 = vpack.c.b16 %v1575, %v1574
    %v1772 = vpack.c.b16 %v1577, %v1576
    %v1773 = vpack.c.b16 %v1579, %v1578
    %v1774 = vpack.c.b16 %v1581, %v1580
    %v1775 = vpack.c.b16 %v1583, %v1582
    %v1776 = vpack.c.b16 %v1585, %v1584
    %v1777 = vpack.c.b16 %v1587, %v1586
    %v1778 = vpack.c.b16 %v1589, %v1588
    %v1779 = vpack.c.b16 %v1591, %v1590
    %v1780 = vpack.c.b16 %v1593, %v1592
    %v1781 = vpack.c.b16 %v1595, %v1594
    %v1782 = vpack.c.b16 %v1597, %v1596
    %v1783 = vpack.c.b16 %v1599, %v1598
    %v1784 = vpack.c.b16 %v1601, %v1600
    %v1785 = vpack.c.b16 %v1603, %v1602
    %v1786 = vpack.c.b16 %v1605, %v1604
    %v1787 = vpack.c.b16 %v1607, %v1606
    %v1788 = vpack.c.b16 %v1609, %v1608
    %v1789 = vpack.c.b16 %v1611, %v1610
    %v1790 = vpack.c.b16 %v1613, %v1612
    %v1791 = vpack.c.b16 %v1615, %v1614
    %v1792 = vpack.c.b16 %v1617, %v1616
    %v1793 = vpack.c.b16 %v1619, %v1618
    %v1794 = vpack.c.b16 %v1621, %v1620
    %v1795 = vpack.c.b16 %v1623, %v1622
    %v1796 = vpack.c.b16 %v1625, %v1624
    %v1797 = vpack.c.b16 %v1627, %v1626
    %v1798 = vpack.c.b16 %v1629, %v1628
    %v1799 = vpack.c.b16 %v1631, %v1630
    %v1800 = vpack.c.b16 %v1633, %v1632
    %v1801 = vpack.c.b16 %v1635, %v1634
    %v1802 = vpack.c.b16 %v1637, %v1636
    %v1803 = vpack.c.b16 %v1639, %v1638
    %v1804 = vpack.c.b16 %v1641, %v1640
    %v1805 = vpack.c.b16 %v1643, %v1642
    %v1806 = vpack.c.b16 %v1645, %v1644
    %v1807 = vpack.c.b16 %v1647, %v1646
    %v1808 = vpack.c.b16 %v1649, %v1648
    %v1809 = vpack.c.b16 %v1651, %v1650
    %v1810 = vpack.c.b16 %v1653, %v1652
    %v1811 = vpack.c.b16 %v1655, %v1654
    %v1812 = vpack.c.b16 %v1657, %v1656
    %v1813 = vpack.c.b16 %v1659, %v1658
    %v1814 = vpack.c.b16 %v1661, %v1660
    %v1815 = vpack.c.b16 %v1663, %v1662
    %v1816 = vpack.c.b16 %v1665, %v1664
    %v1817 = vpack.c.b16 %v1667, %v1666
    %v1818 = vpack.c.b16 %v1669, %v1668
    %v1819 = vpack.c.b16 %v1671, %v1670
    %v1820 = vpack.c.b16 %v1673, %v1672
    %v1821 = vpack.c.b16 %v1675, %v1674
    %v1822 = vpack.c.b16 %v1677, %v1676
    %v1823 = vpack.c.b16 %v1679, %v1678
    %v1824 = vpack.c.b16 %v1681, %v1680
    %v1825 = vpack.c.b16 %v1683, %v1682
    %v1826 = vpack.c.b16 %v1685, %v1684
    %v1827 = vpack.c.b16 %v1687, %v1686
    %v1828 = vpack.c.b16 %v1689, %v1688
    %v1829 = vpack.c.b16 %v1691, %v1690
    %v1830 = vpack.c.b16 %v1693, %v1692
    %v1831 = vpack.c.b16 %v1695, %v1694
    %v1832 = vpack.c.b16 %v1697, %v1696
    %v1833 = vpack.c.b16 %v1699, %v1698
    %v1834 = vpack.c.b16 %v1701, %v1700
    %v1835 = vpack.c.b16 %v1703, %v1702
    %v1836 = vpack.c.b16 %v1705, %v1704
    %v1837 = vpack.c.b16 %v1707, %v1706
    %v1838 = vpack.c.b16 %v1709, %v1708
    %v1839 = vpack.c.b16 %v1711, %v1710
    %1968 = vmatprep.subr.bf16.mxu0 0
    %1969 = vmatpush1.bf16.msra.mxu0 %v1719
    %1970 = vmatprep.subr.bf16.mxu0 0
    %1971 = vmatpush1.bf16.msra.mxu0 %v1718
    %1972 = vmatprep.subr.bf16.mxu0 0
    %1973 = vmatpush1.bf16.msra.mxu0 %v1717
    %1974 = vmatprep.subr.bf16.mxu0 0
    %1975 = vmatpush1.bf16.msra.mxu0 %v1716
    %1976 = vmatprep.subr.bf16.mxu0 0
    %1977 = vmatpush1.bf16.msra.mxu0 %v1715
    %1978 = vmatprep.subr.bf16.mxu0 0
    %1979 = vmatpush1.bf16.msra.mxu0 %v1714
    %1980 = vmatprep.subr.bf16.mxu0 0
    %1981 = vmatpush1.bf16.msra.mxu0 %v1713
    %1982 = vmatprep.subr.bf16.mxu0 0
    %1983 = vmatpush1.bf16.msra.mxu0 %v1712
    %1984 = vmatprep.subr.bf16.mxu0 0
    %1985 = vmatpush2.bf16.msra.mxu0 %v1727
    %1986 = vmatprep.subr.bf16.mxu0 0
    %1987 = vmatpush2.bf16.msra.mxu0 %v1726
    %1988 = vmatprep.subr.bf16.mxu0 0
    %1989 = vmatpush2.bf16.msra.mxu0 %v1725
    %1990 = vmatprep.subr.bf16.mxu0 0
    %1991 = vmatpush2.bf16.msra.mxu0 %v1724
    %1992 = vmatprep.subr.bf16.mxu0 0
    %1993 = vmatpush2.bf16.msra.mxu0 %v1723
    %1994 = vmatprep.subr.bf16.mxu0 0
    %1995 = vmatpush2.bf16.msra.mxu0 %v1722
    %1996 = vmatprep.subr.bf16.mxu0 0
    %1997 = vmatpush2.bf16.msra.mxu0 %v1721
    %1998 = vmatprep.subr.bf16.mxu0 0
    %1999 = vmatpush2.bf16.msra.mxu0 %v1720
    %2000 = vmatprep.mubr.bf16.mxu0 %v923
    %2001 = vmatmul.mubr.bf16.gmra.mxu0 %v922
    %v2002 = vpop.f32.mrf.mxu0
    %v2003 = vadd.f32 %v1198, %v2002
    %v2004 = vpop.f32.mrf.mxu0
    %v2005 = vpop.f32.mrf.mxu0
    %v2006 = vpop.f32.mrf.mxu0
    %2007 = vdwg.mxu0
    %2008 = vmatprep.subr.bf16.mxu0 0
    %2009 = vmatpush1.bf16.msra.mxu0 %v1735
    %2010 = vmatprep.subr.bf16.mxu0 0
    %2011 = vmatpush1.bf16.msra.mxu0 %v1734
    %2012 = vmatprep.subr.bf16.mxu0 0
    %2013 = vmatpush1.bf16.msra.mxu0 %v1733
    %2014 = vmatprep.subr.bf16.mxu0 0
    %2015 = vmatpush1.bf16.msra.mxu0 %v1732
    %2016 = vmatprep.subr.bf16.mxu0 0
    %2017 = vmatpush1.bf16.msra.mxu0 %v1731
    %2018 = vmatprep.subr.bf16.mxu0 0
    %2019 = vmatpush1.bf16.msra.mxu0 %v1730
    %2020 = vmatprep.subr.bf16.mxu0 0
    %2021 = vmatpush1.bf16.msra.mxu0 %v1729
    %2022 = vmatprep.subr.bf16.mxu0 0
    %2023 = vmatpush1.bf16.msra.mxu0 %v1728
    %2024 = vmatprep.subr.bf16.mxu0 0
    %2025 = vmatpush2.bf16.msra.mxu0 %v1743
    %2026 = vmatprep.subr.bf16.mxu0 0
    %2027 = vmatpush2.bf16.msra.mxu0 %v1742
    %2028 = vmatprep.subr.bf16.mxu0 0
    %2029 = vmatpush2.bf16.msra.mxu0 %v1741
    %2030 = vmatprep.subr.bf16.mxu0 0
    %2031 = vmatpush2.bf16.msra.mxu0 %v1740
    %2032 = vmatprep.subr.bf16.mxu0 0
    %2033 = vmatpush2.bf16.msra.mxu0 %v1739
    %2034 = vmatprep.subr.bf16.mxu0 0
    %2035 = vmatpush2.bf16.msra.mxu0 %v1738
    %2036 = vmatprep.subr.bf16.mxu0 0
    %2037 = vmatpush2.bf16.msra.mxu0 %v1737
    %2038 = vmatprep.subr.bf16.mxu0 0
    %2039 = vmatpush2.bf16.msra.mxu0 %v1736
    %2040 = vmatprep.mubr.bf16.mxu0 %v925
    %2041 = vmatmul.mubr.bf16.gmra.mxu0 %v924
    %v2042 = vpop.f32.mrf.mxu0
    %v2043 = vadd.f32 %v2003, %v2042
    %v2044 = vpop.f32.mrf.mxu0
    %v2045 = vpop.f32.mrf.mxu0
    %v2046 = vpop.f32.mrf.mxu0
    %2047 = vdwg.mxu0
    %2048 = vmatprep.subr.bf16.mxu0 0
    %2049 = vmatpush1.bf16.msra.mxu0 %v1751
    %2050 = vmatprep.subr.bf16.mxu0 0
    %2051 = vmatpush1.bf16.msra.mxu0 %v1750
    %2052 = vmatprep.subr.bf16.mxu0 0
    %2053 = vmatpush1.bf16.msra.mxu0 %v1749
    %2054 = vmatprep.subr.bf16.mxu0 0
    %2055 = vmatpush1.bf16.msra.mxu0 %v1748
    %2056 = vmatprep.subr.bf16.mxu0 0
    %2057 = vmatpush1.bf16.msra.mxu0 %v1747
    %2058 = vmatprep.subr.bf16.mxu0 0
    %2059 = vmatpush1.bf16.msra.mxu0 %v1746
    %2060 = vmatprep.subr.bf16.mxu0 0
    %2061 = vmatpush1.bf16.msra.mxu0 %v1745
    %2062 = vmatprep.subr.bf16.mxu0 0
    %2063 = vmatpush1.bf16.msra.mxu0 %v1744
    %2064 = vmatprep.subr.bf16.mxu0 0
    %2065 = vmatpush2.bf16.msra.mxu0 %v1759
    %2066 = vmatprep.subr.bf16.mxu0 0
    %2067 = vmatpush2.bf16.msra.mxu0 %v1758
    %2068 = vmatprep.subr.bf16.mxu0 0
    %2069 = vmatpush2.bf16.msra.mxu0 %v1757
    %2070 = vmatprep.subr.bf16.mxu0 0
    %2071 = vmatpush2.bf16.msra.mxu0 %v1756
    %2072 = vmatprep.subr.bf16.mxu0 0
    %2073 = vmatpush2.bf16.msra.mxu0 %v1755
    %2074 = vmatprep.subr.bf16.mxu0 0
    %2075 = vmatpush2.bf16.msra.mxu0 %v1754
    %2076 = vmatprep.subr.bf16.mxu0 0
    %2077 = vmatpush2.bf16.msra.mxu0 %v1753
    %2078 = vmatprep.subr.bf16.mxu0 0
    %2079 = vmatpush2.bf16.msra.mxu0 %v1752
    %2080 = vmatprep.mubr.bf16.mxu0 %v927
    %2081 = vmatmul.mubr.bf16.gmra.mxu0 %v926
    %v2082 = vpop.f32.mrf.mxu0
    %v2083 = vadd.f32 %v2043, %v2082
    %v2084 = vpop.f32.mrf.mxu0
    %v2085 = vpop.f32.mrf.mxu0
    %v2086 = vpop.f32.mrf.mxu0
    %2087 = vdwg.mxu0
    %2088 = vmatprep.subr.bf16.mxu0 0
    %2089 = vmatpush1.bf16.msra.mxu0 %v1767
    %2090 = vmatprep.subr.bf16.mxu0 0
    %2091 = vmatpush1.bf16.msra.mxu0 %v1766
    %2092 = vmatprep.subr.bf16.mxu0 0
    %2093 = vmatpush1.bf16.msra.mxu0 %v1765
    %2094 = vmatprep.subr.bf16.mxu0 0
    %2095 = vmatpush1.bf16.msra.mxu0 %v1764
    %2096 = vmatprep.subr.bf16.mxu0 0
    %2097 = vmatpush1.bf16.msra.mxu0 %v1763
    %2098 = vmatprep.subr.bf16.mxu0 0
    %2099 = vmatpush1.bf16.msra.mxu0 %v1762
    %2100 = vmatprep.subr.bf16.mxu0 0
    %2101 = vmatpush1.bf16.msra.mxu0 %v1761
    %2102 = vmatprep.subr.bf16.mxu0 0
    %2103 = vmatpush1.bf16.msra.mxu0 %v1760
    %2104 = vmatprep.subr.bf16.mxu0 0
    %2105 = vmatpush2.bf16.msra.mxu0 %v1775
    %2106 = vmatprep.subr.bf16.mxu0 0
    %2107 = vmatpush2.bf16.msra.mxu0 %v1774
    %2108 = vmatprep.subr.bf16.mxu0 0
    %2109 = vmatpush2.bf16.msra.mxu0 %v1773
    %2110 = vmatprep.subr.bf16.mxu0 0
    %2111 = vmatpush2.bf16.msra.mxu0 %v1772
    %2112 = vmatprep.subr.bf16.mxu0 0
    %2113 = vmatpush2.bf16.msra.mxu0 %v1771
    %2114 = vmatprep.subr.bf16.mxu0 0
    %2115 = vmatpush2.bf16.msra.mxu0 %v1770
    %2116 = vmatprep.subr.bf16.mxu0 0
    %2117 = vmatpush2.bf16.msra.mxu0 %v1769
    %2118 = vmatprep.subr.bf16.mxu0 0
    %2119 = vmatpush2.bf16.msra.mxu0 %v1768
    %2120 = vmatprep.mubr.bf16.mxu0 %v929
    %2121 = vmatmul.mubr.bf16.gmra.mxu0 %v928
    %v2122 = vpop.f32.mrf.mxu0
    %v2123 = vadd.f32 %v2083, %v2122
    %v2124 = vpop.f32.mrf.mxu0
    %v2125 = vpop.f32.mrf.mxu0
    %v2126 = vpop.f32.mrf.mxu0
    %2127 = vdwg.mxu0
    %2128 = vmatprep.subr.bf16.mxu0 0
    %2129 = vmatpush1.bf16.msra.mxu0 %v1783
    %2130 = vmatprep.subr.bf16.mxu0 0
    %2131 = vmatpush1.bf16.msra.mxu0 %v1782
    %2132 = vmatprep.subr.bf16.mxu0 0
    %2133 = vmatpush1.bf16.msra.mxu0 %v1781
    %2134 = vmatprep.subr.bf16.mxu0 0
    %2135 = vmatpush1.bf16.msra.mxu0 %v1780
    %2136 = vmatprep.subr.bf16.mxu0 0
    %2137 = vmatpush1.bf16.msra.mxu0 %v1779
    %2138 = vmatprep.subr.bf16.mxu0 0
    %2139 = vmatpush1.bf16.msra.mxu0 %v1778
    %2140 = vmatprep.subr.bf16.mxu0 0
    %2141 = vmatpush1.bf16.msra.mxu0 %v1777
    %2142 = vmatprep.subr.bf16.mxu0 0
    %2143 = vmatpush1.bf16.msra.mxu0 %v1776
    %2144 = vmatprep.subr.bf16.mxu0 0
    %2145 = vmatpush2.bf16.msra.mxu0 %v1791
    %2146 = vmatprep.subr.bf16.mxu0 0
    %2147 = vmatpush2.bf16.msra.mxu0 %v1790
    %2148 = vmatprep.subr.bf16.mxu0 0
    %2149 = vmatpush2.bf16.msra.mxu0 %v1789
    %2150 = vmatprep.subr.bf16.mxu0 0
    %2151 = vmatpush2.bf16.msra.mxu0 %v1788
    %2152 = vmatprep.subr.bf16.mxu0 0
    %2153 = vmatpush2.bf16.msra.mxu0 %v1787
    %2154 = vmatprep.subr.bf16.mxu0 0
    %2155 = vmatpush2.bf16.msra.mxu0 %v1786
    %2156 = vmatprep.subr.bf16.mxu0 0
    %2157 = vmatpush2.bf16.msra.mxu0 %v1785
    %2158 = vmatprep.subr.bf16.mxu0 0
    %2159 = vmatpush2.bf16.msra.mxu0 %v1784
    %2160 = vmatprep.mubr.bf16.mxu0 %v931
    %2161 = vmatmul.mubr.bf16.gmra.mxu0 %v930
    %v2162 = vpop.f32.mrf.mxu0
    %v2163 = vadd.f32 %v2123, %v2162
    %v2164 = vpop.f32.mrf.mxu0
    %v2165 = vpop.f32.mrf.mxu0
    %v2166 = vpop.f32.mrf.mxu0
    %2167 = vdwg.mxu0
    %2168 = vmatprep.subr.bf16.mxu0 0
    %2169 = vmatpush1.bf16.msra.mxu0 %v1799
    %2170 = vmatprep.subr.bf16.mxu0 0
    %2171 = vmatpush1.bf16.msra.mxu0 %v1798
    %2172 = vmatprep.subr.bf16.mxu0 0
    %2173 = vmatpush1.bf16.msra.mxu0 %v1797
    %2174 = vmatprep.subr.bf16.mxu0 0
    %2175 = vmatpush1.bf16.msra.mxu0 %v1796
    %2176 = vmatprep.subr.bf16.mxu0 0
    %2177 = vmatpush1.bf16.msra.mxu0 %v1795
    %2178 = vmatprep.subr.bf16.mxu0 0
    %2179 = vmatpush1.bf16.msra.mxu0 %v1794
    %2180 = vmatprep.subr.bf16.mxu0 0
    %2181 = vmatpush1.bf16.msra.mxu0 %v1793
    %2182 = vmatprep.subr.bf16.mxu0 0
    %2183 = vmatpush1.bf16.msra.mxu0 %v1792
    %2184 = vmatprep.subr.bf16.mxu0 0
    %2185 = vmatpush2.bf16.msra.mxu0 %v1807
    %2186 = vmatprep.subr.bf16.mxu0 0
    %2187 = vmatpush2.bf16.msra.mxu0 %v1806
    %2188 = vmatprep.subr.bf16.mxu0 0
    %2189 = vmatpush2.bf16.msra.mxu0 %v1805
    %2190 = vmatprep.subr.bf16.mxu0 0
    %2191 = vmatpush2.bf16.msra.mxu0 %v1804
    %2192 = vmatprep.subr.bf16.mxu0 0
    %2193 = vmatpush2.bf16.msra.mxu0 %v1803
    %2194 = vmatprep.subr.bf16.mxu0 0
    %2195 = vmatpush2.bf16.msra.mxu0 %v1802
    %2196 = vmatprep.subr.bf16.mxu0 0
    %2197 = vmatpush2.bf16.msra.mxu0 %v1801
    %2198 = vmatprep.subr.bf16.mxu0 0
    %2199 = vmatpush2.bf16.msra.mxu0 %v1800
    %2200 = vmatprep.mubr.bf16.mxu0 %v933
    %2201 = vmatmul.mubr.bf16.gmra.mxu0 %v932
    %v2202 = vpop.f32.mrf.mxu0
    %v2203 = vadd.f32 %v2163, %v2202
    %v2204 = vpop.f32.mrf.mxu0
    %v2205 = vpop.f32.mrf.mxu0
    %v2206 = vpop.f32.mrf.mxu0
    %2207 = vdwg.mxu0
    %2208 = vmatprep.subr.bf16.mxu0 0
    %2209 = vmatpush1.bf16.msra.mxu0 %v1815
    %2210 = vmatprep.subr.bf16.mxu0 0
    %2211 = vmatpush1.bf16.msra.mxu0 %v1814
    %2212 = vmatprep.subr.bf16.mxu0 0
    %2213 = vmatpush1.bf16.msra.mxu0 %v1813
    %2214 = vmatprep.subr.bf16.mxu0 0
    %2215 = vmatpush1.bf16.msra.mxu0 %v1812
    %2216 = vmatprep.subr.bf16.mxu0 0
    %2217 = vmatpush1.bf16.msra.mxu0 %v1811
    %2218 = vmatprep.subr.bf16.mxu0 0
    %2219 = vmatpush1.bf16.msra.mxu0 %v1810
    %2220 = vmatprep.subr.bf16.mxu0 0
    %2221 = vmatpush1.bf16.msra.mxu0 %v1809
    %2222 = vmatprep.subr.bf16.mxu0 0
    %2223 = vmatpush1.bf16.msra.mxu0 %v1808
    %2224 = vmatprep.subr.bf16.mxu0 0
    %2225 = vmatpush2.bf16.msra.mxu0 %v1823
    %2226 = vmatprep.subr.bf16.mxu0 0
    %2227 = vmatpush2.bf16.msra.mxu0 %v1822
    %2228 = vmatprep.subr.bf16.mxu0 0
    %2229 = vmatpush2.bf16.msra.mxu0 %v1821
    %2230 = vmatprep.subr.bf16.mxu0 0
    %2231 = vmatpush2.bf16.msra.mxu0 %v1820
    %2232 = vmatprep.subr.bf16.mxu0 0
    %2233 = vmatpush2.bf16.msra.mxu0 %v1819
    %2234 = vmatprep.subr.bf16.mxu0 0
    %2235 = vmatpush2.bf16.msra.mxu0 %v1818
    %2236 = vmatprep.subr.bf16.mxu0 0
    %2237 = vmatpush2.bf16.msra.mxu0 %v1817
    %2238 = vmatprep.subr.bf16.mxu0 0
    %2239 = vmatpush2.bf16.msra.mxu0 %v1816
    %2240 = vmatprep.mubr.bf16.mxu0 %v935
    %2241 = vmatmul.mubr.bf16.gmra.mxu0 %v934
    %v2242 = vpop.f32.mrf.mxu0
    %v2243 = vadd.f32 %v2203, %v2242
    %v2244 = vpop.f32.mrf.mxu0
    %v2245 = vpop.f32.mrf.mxu0
    %v2246 = vpop.f32.mrf.mxu0
    %2247 = vdwg.mxu0
    %2248 = vmatprep.subr.bf16.mxu0 0
    %2249 = vmatpush1.bf16.msra.mxu0 %v1831
    %2250 = vmatprep.subr.bf16.mxu0 0
    %2251 = vmatpush1.bf16.msra.mxu0 %v1830
    %2252 = vmatprep.subr.bf16.mxu0 0
    %2253 = vmatpush1.bf16.msra.mxu0 %v1829
    %2254 = vmatprep.subr.bf16.mxu0 0
    %2255 = vmatpush1.bf16.msra.mxu0 %v1828
    %2256 = vmatprep.subr.bf16.mxu0 0
    %2257 = vmatpush1.bf16.msra.mxu0 %v1827
    %2258 = vmatprep.subr.bf16.mxu0 0
    %2259 = vmatpush1.bf16.msra.mxu0 %v1826
    %2260 = vmatprep.subr.bf16.mxu0 0
    %2261 = vmatpush1.bf16.msra.mxu0 %v1825
    %2262 = vmatprep.subr.bf16.mxu0 0
    %2263 = vmatpush1.bf16.msra.mxu0 %v1824
    %2264 = vmatprep.subr.bf16.mxu0 0
    %2265 = vmatpush2.bf16.msra.mxu0 %v1839
    %2266 = vmatprep.subr.bf16.mxu0 0
    %2267 = vmatpush2.bf16.msra.mxu0 %v1838
    %2268 = vmatprep.subr.bf16.mxu0 0
    %2269 = vmatpush2.bf16.msra.mxu0 %v1837
    %2270 = vmatprep.subr.bf16.mxu0 0
    %2271 = vmatpush2.bf16.msra.mxu0 %v1836
    %2272 = vmatprep.subr.bf16.mxu0 0
    %2273 = vmatpush2.bf16.msra.mxu0 %v1835
    %2274 = vmatprep.subr.bf16.mxu0 0
    %2275 = vmatpush2.bf16.msra.mxu0 %v1834
    %2276 = vmatprep.subr.bf16.mxu0 0
    %2277 = vmatpush2.bf16.msra.mxu0 %v1833
    %2278 = vmatprep.subr.bf16.mxu0 0
    %2279 = vmatpush2.bf16.msra.mxu0 %v1832
    %2280 = vmatprep.mubr.bf16.mxu0 %v937
    %2281 = vmatmul.mubr.bf16.gmra.mxu0 %v936
    %v2282 = vpop.f32.mrf.mxu0
    %v2283 = vadd.f32 %v2243, %v2282
    %v2284 = vpop.f32.mrf.mxu0
    %v2285 = vpop.f32.mrf.mxu0
    %v2286 = vpop.f32.mrf.mxu0
    %2287 = vdwg.mxu0
    %v2288 = vmul.f32 %v2283, 0.01
    %v2289 = vmax.f32 %v2283, %v2288
    %v2290 = vpack.c.bf16 %v2289, %v2289
    %v2291 = vld [vmem:[#allocation8] sm:$0xf]
    %v2292 = vld [vmem:[#allocation8 + $0x4] sm:$0xf]
    %v2293 = vld [vmem:[#allocation8 + $0x8] sm:$0xf]
    %v2294 = vld [vmem:[#allocation8 + $0xc] sm:$0xf]
    %v2295 = vld [vmem:[#allocation8 + $0x10] sm:$0xf]
    %v2296 = vld [vmem:[#allocation8 + $0x14] sm:$0xf]
    %v2297 = vld [vmem:[#allocation8 + $0x18] sm:$0xf]
    %v2298 = vld [vmem:[#allocation8 + $0x1c] sm:$0xf]
    %v2299 = vld [vmem:[#allocation8 + $0x20] sm:$0xf]
    %v2300 = vld [vmem:[#allocation8 + $0x24] sm:$0xf]
    %v2301 = vld [vmem:[#allocation8 + $0x28] sm:$0xf]
    %v2302 = vld [vmem:[#allocation8 + $0x2c] sm:$0xf]
    %v2303 = vld [vmem:[#allocation8 + $0x30] sm:$0xf]
    %v2304 = vld [vmem:[#allocation8 + $0x34] sm:$0xf]
    %v2305 = vld [vmem:[#allocation8 + $0x38] sm:$0xf]
    %v2306 = vld [vmem:[#allocation8 + $0x3c] sm:$0xf]
    %v2308 = vlaneseq
    %v2309 = vshrl.u32 %v2308, 7
    %v2310 = vsub.s32 0, %v2309
    %v2311 = vrot.slane %v89, %v2310
    %v2329 = vunpack.c.l.b16 %v2291
    %v2330 = vunpack.c.l.b16 %v2292
    %v2331 = vunpack.c.l.b16 %v2293
    %v2332 = vunpack.c.l.b16 %v2294
    %v2333 = vunpack.c.l.b16 %v2295
    %v2334 = vunpack.c.l.b16 %v2296
    %v2335 = vunpack.c.l.b16 %v2297
    %v2336 = vunpack.c.l.b16 %v2298
    %v2337 = vunpack.c.l.b16 %v2299
    %v2338 = vunpack.c.l.b16 %v2300
    %v2339 = vunpack.c.l.b16 %v2301
    %v2340 = vunpack.c.l.b16 %v2302
    %v2341 = vunpack.c.l.b16 %v2303
    %v2342 = vunpack.c.l.b16 %v2304
    %v2343 = vunpack.c.l.b16 %v2305
    %v2344 = vunpack.c.l.b16 %v2306
    %v2345 = vpack.c.b16 %v2330, %v2329
    %v2346 = vpack.c.b16 %v2332, %v2331
    %v2347 = vpack.c.b16 %v2334, %v2333
    %v2348 = vpack.c.b16 %v2336, %v2335
    %v2349 = vpack.c.b16 %v2338, %v2337
    %v2350 = vpack.c.b16 %v2340, %v2339
    %v2351 = vpack.c.b16 %v2342, %v2341
    %v2352 = vpack.c.b16 %v2344, %v2343
    %2361 = vmatprep.subr.bf16.mxu0 0
    %2362 = vmatpush1.bf16.msra.mxu0 %v2352
    %2363 = vmatprep.subr.bf16.mxu0 0
    %2364 = vmatpush1.bf16.msra.mxu0 %v2351
    %2365 = vmatprep.subr.bf16.mxu0 0
    %2366 = vmatpush1.bf16.msra.mxu0 %v2350
    %2367 = vmatprep.subr.bf16.mxu0 0
    %2368 = vmatpush1.bf16.msra.mxu0 %v2349
    %2369 = vmatprep.subr.bf16.mxu0 0
    %2370 = vmatpush1.bf16.msra.mxu0 %v2348
    %2371 = vmatprep.subr.bf16.mxu0 0
    %2372 = vmatpush1.bf16.msra.mxu0 %v2347
    %2373 = vmatprep.subr.bf16.mxu0 0
    %2374 = vmatpush1.bf16.msra.mxu0 %v2346
    %2375 = vmatprep.subr.bf16.mxu0 0
    %2376 = vmatpush1.bf16.msra.mxu0 %v2345
    %2377 = vmatprep.subr.bf16.mxu0 0
    %2378 = vmatpush2.bf16.msra.mxu0 0
    %2379 = vmatprep.subr.bf16.mxu0 0
    %2380 = vmatpush2.bf16.msra.mxu0 0
    %2381 = vmatprep.subr.bf16.mxu0 0
    %2382 = vmatpush2.bf16.msra.mxu0 0
    %2383 = vmatprep.subr.bf16.mxu0 0
    %2384 = vmatpush2.bf16.msra.mxu0 0
    %2385 = vmatprep.subr.bf16.mxu0 0
    %2386 = vmatpush2.bf16.msra.mxu0 0
    %2387 = vmatprep.subr.bf16.mxu0 0
    %2388 = vmatpush2.bf16.msra.mxu0 0
    %2389 = vmatprep.subr.bf16.mxu0 0
    %2390 = vmatpush2.bf16.msra.mxu0 0
    %2391 = vmatprep.subr.bf16.mxu0 0
    %2392 = vmatpush2.bf16.msra.mxu0 0
    %2393 = vmatprep.mubr.bf16.mxu0 0
    %2394 = vmatmul.mubr.bf16.gmra.mxu0 %v2290
    %v2395 = vpop.f32.mrf.mxu0
    %v2396 = vadd.f32 %v2311, %v2395
    %v2397 = vpop.f32.mrf.mxu0
    %v2398 = vpop.f32.mrf.mxu0
    %v2399 = vpop.f32.mrf.mxu0
    %2400 = vdwg.mxu0
    %2401 = vmax.xlane.f32.xlu0 %v2396
    %v2402 = vpop.xlane.xlu0 %2401
    %v2403 = vsub.f32 %v2396, %v2402
    %v2404 = vmul.f32 %v2403, 1.442695
    %v2405 = vpow.pop %v2404
    %2406 = vadd.xlane.f32.xlu0 %v2405
    %v2407 = vpop.xlane.xlu0 %2406
    %v2408 = vrcp.pop %v2407
    %v2409 = vmul.f32 %v2405, %v2408
    %2410 = vst [vmem:[#allocation11] sm:$0xff] %v2409
    // Predicated region
    $region42: #{tpu_custom_call.1} parent=1 // pred_check
      _
    $region43: #{tpu_custom_call.1} parent=1 // pred_check_branch
      %2412 = sbr.rel (0) target = $region45
    $region44: #{tpu_custom_call.1} parent=1 // pred_region
      %s2414 = ssub.s32 128, 128
      %2415 = vsyncadd [#allocation4], %s2414
      %s2417 = sshll.u32 [#allocation11], 4
      %s2418 = int_to_ptr.vmem [resolvable:$true] %s2417
      %2420 = dma.vmem_to_hbm [thread:$0]  %s2418, 128, %s5, [#allocation4]
    $region45: #{tpu_custom_call.1} parent=1 // pred_fallthru
      _
    // Predicated region
    $region46: #{tpu_custom_call.1} parent=1 // pred_check
      _
    $region47: #{tpu_custom_call.1} parent=1 // pred_check_branch
      %2422 = sbr.rel (0) target = $region49
    $region48: #{tpu_custom_call.1} parent=1 // pred_region
      %2423 = dma.done [#allocation4], 128
    $region49: #{tpu_custom_call.1} parent=1 // pred_fallthru
      _
    %2424 = vsyncpa [#allocation3], 1
    %2425 = vsyncpa [#allocation6], 1
    %2426 = vsyncpa [#allocation9], 1
    %2427 = vsyncpa [#allocation4], 1

</llo_original>
